<compile_context>
chip_gen: v7x
topology: tpu7x:2x2x1
jax: 0.10.0
libtpu: 0.0.40
codegen_flags: <defaults>
</compile_context>

<pallas_src>
import functools

import jax
import jax.numpy as jnp
from jax.experimental import pallas as pl
from jax.experimental.pallas import tpu as pltpu


def _conv_gn_relu_kernel(x_ref, w_ref, p_ref, o_ref,
                         *, H, W, Cin, Cout, num_groups, eps):
    # x_ref: (1, Cin, H, W)   one batch element, unpadded, NCHW, f32
    # w_ref: (Cout, 9*Cin)    conv weights, bf16, columns ordered (ky, kx, ci)
    # p_ref: (Cout, 3)        packed [bias | gamma | beta], f32
    # o_ref: (1, Cout, H*W)   output tile (lane-dense last dim)
    HW = H * W
    group_size = Cout // num_groups

    x = x_ref[0]                                            # (Cin, H, W) f32

    # --- fused zero padding (padding=1), done in VMEM via concatenates ---
    zrow = jnp.zeros((Cin, 1, W), jnp.float32)
    xp = jnp.concatenate([zrow, x, zrow], axis=1)           # (Cin, H+2, W)
    zcol = jnp.zeros((Cin, H + 2, 1), jnp.float32)
    xp = jnp.concatenate([zcol, xp, zcol], axis=2)          # (Cin, H+2, W+2)

    # --- im2col: one (9*Cin, H*W) patch matrix, single MXU contraction ---
    windows = [xp[:, dy:dy + H, dx:dx + W]                  # 9 x (Cin, H, W)
               for dy in range(3) for dx in range(3)]
    patches = jnp.concatenate(windows, axis=0).reshape(9 * Cin, HW)
    patches = patches.astype(jnp.bfloat16)                  # bf16 operands, f32 acc

    acc = jnp.dot(w_ref[...], patches,
                  preferred_element_type=jnp.float32)       # (Cout, H*W) f32

    bias = p_ref[:, 0:1].astype(jnp.float32)                # (Cout, 1)
    gamma = p_ref[:, 1:2].astype(jnp.float32)
    beta = p_ref[:, 2:3].astype(jnp.float32)

    # --- GroupNorm stats on the native 2D layout; bias folded in on the column ---
    # sum/sumsq of (acc + bias) derived from sums of raw acc (no slab-wide +bias pass):
    #   sum(acc+b)   = sum(acc) + HW*b
    #   sumsq(acc+b) = sumsq(acc) + 2*b*sum(acc) + HW*b^2
    ch_sum = jnp.sum(acc, axis=1, keepdims=True)            # (Cout, 1) lane reduce
    ch_sumsq = jnp.sum(acc * acc, axis=1, keepdims=True)    # (Cout, 1) f32
    fhw = float(HW)
    ch_sum_b = ch_sum + fhw * bias
    ch_sumsq_b = ch_sumsq + 2.0 * bias * ch_sum + fhw * (bias * bias)

    if group_size == 1:
        grp_sum, grp_sumsq = ch_sum_b, ch_sumsq_b
    else:
        gs = jnp.sum(ch_sum_b.reshape(num_groups, group_size), axis=1, keepdims=True)
        gss = jnp.sum(ch_sumsq_b.reshape(num_groups, group_size), axis=1, keepdims=True)
        grp_sum = jnp.broadcast_to(gs, (num_groups, group_size)).reshape(Cout, 1)
        grp_sumsq = jnp.broadcast_to(gss, (num_groups, group_size)).reshape(Cout, 1)

    inv_n = 1.0 / float(HW * group_size)
    mean = grp_sum * inv_n                                  # (Cout, 1)
    var = jnp.maximum(grp_sumsq * inv_n - mean * mean, 0.0)  # E[x^2]-E[x]^2, clamped
    inv_std = jax.lax.rsqrt(var + eps)                      # EUP

    # Single fused per-channel affine over the slab: y = acc*scale + shift
    scale = gamma * inv_std                                 # (Cout, 1)
    shift = (bias - mean) * scale + beta                    # (Cout, 1)
    y = acc * scale + shift

    # --- ReLU + lane-dense store ---
    o_ref[0] = jnp.maximum(y, 0.0).astype(o_ref.dtype)      # (Cout, H*W)


def double_conv_forward(x_nchw, w_oihw, bias, gamma, beta,
                        *, num_groups=64, eps=1e-5):
    """Forward pass matching the PyTorch module (batch_norm=True branch).

    x_nchw : (B, Cin, H, W)    float32
    w_oihw : (Cout, Cin, 3, 3) float32
    bias, gamma, beta : (Cout,)
    returns: (B, Cout, H, W)
    """
    B, Cin, H, W = x_nchw.shape
    Cout = w_oihw.shape[0]
    assert Cout % num_groups == 0

    # One-time tiny parameter repacking (no activation-sized wrapper work):
    #   weights -> (Cout, 9*Cin) bf16, column order (ky, kx, ci) matching the kernel.
    #   bias/gamma/beta -> single (Cout, 3) slab.
    w2 = jnp.transpose(w_oihw, (0, 2, 3, 1)).reshape(Cout, 9 * Cin)
    w2 = w2.astype(jnp.bfloat16)
    params = jnp.stack([bias, gamma, beta], axis=1).astype(jnp.float32)

    kernel = functools.partial(_conv_gn_relu_kernel,
                               H=H, W=W, Cin=Cin, Cout=Cout,
                               num_groups=num_groups, eps=eps)

    out = pl.pallas_call(
        kernel,
        out_shape=jax.ShapeDtypeStruct((B, Cout, H * W), jnp.float32),
        grid_spec=pltpu.PrefetchScalarGridSpec(
            num_scalar_prefetch=0,
            grid=(B,),
            in_specs=[
                pl.BlockSpec((1, Cin, H, W), lambda b: (b, 0, 0, 0)),
                pl.BlockSpec((Cout, 9 * Cin), lambda b: (0, 0)),
                pl.BlockSpec((Cout, 3), lambda b: (0, 0)),
            ],
            out_specs=pl.BlockSpec((1, Cout, H * W), lambda b: (b, 0, 0)),
        ),
        compiler_params=pltpu.CompilerParams(
            dimension_semantics=("parallel",)),
    )(x_nchw, w2, params)

    # (B, Cout, H*W) -> (B, Cout, H, W): pure metadata reshape, no transpose/copy.
    return out.reshape(B, Cout, H, W)


def _reference_forward(x_nchw, w_oihw, bias, gamma, beta, *, num_groups=64, eps=1e-5):
    # Pure-JAX f32 reference (lax conv + manual GroupNorm + ReLU) for validation.
    y = jax.lax.conv_general_dilated(
        x_nchw, w_oihw, window_strides=(1, 1), padding=((1, 1), (1, 1)),
        dimension_numbers=("NCHW", "OIHW", "NCHW"))
    y = y + bias[None, :, None, None]
    B, C, H, W = y.shape
    g = y.reshape(B, num_groups, C // num_groups, H, W)
    mean = jnp.mean(g, axis=(2, 3, 4), keepdims=True)
    var = jnp.mean((g - mean) ** 2, axis=(2, 3, 4), keepdims=True)
    g = (g - mean) / jnp.sqrt(var + eps)
    y = g.reshape(B, C, H, W) * gamma[None, :, None, None] + beta[None, :, None, None]
    return jnp.maximum(y, 0.0)


if __name__ == "__main__":
    # GroupNorm(64, mid_channels) requires mid_channels % 64 == 0 -> Cout = 64.
    B, Cin, H, W = 2, 4, 16, 16
    Cout = 64

    key = jax.random.PRNGKey(0)
    kx, kw, kb, kg, kbe = jax.random.split(key, 5)

    x = jax.random.normal(kx, (B, Cin, H, W), dtype=jnp.float32)
    w = jax.random.normal(kw, (Cout, Cin, 3, 3), dtype=jnp.float32) * 0.1
    bias = jax.random.normal(kb, (Cout,), dtype=jnp.float32) * 0.1
    gamma = 1.0 + 0.1 * jax.random.normal(kg, (Cout,), dtype=jnp.float32)
    beta = 0.1 * jax.random.normal(kbe, (Cout,), dtype=jnp.float32)

    out = double_conv_forward(x, w, bias, gamma, beta)
    out = jax.block_until_ready(out)

    ref = _reference_forward(x, w, bias, gamma, beta)
    assert out.shape == (B, Cout, H, W)
    # bf16 MXU operands (f32 accumulation) -> bf16-appropriate tolerance vs f32 ref.
    assert jnp.allclose(out, ref, atol=5e-2, rtol=5e-2), "mismatch vs reference"

    print("KERNEL_OK")
</pallas_src>

<mosaic_0001>
module attributes {stable_mosaic.version = 11 : i64} {
  func.func @_conv_gn_relu_kernel(%arg0: i32, %arg1: memref<1x4x16x16xf32, #tpu.memory_space<vmem>>, %arg2: memref<64x36xbf16, #tpu.memory_space<vmem>>, %arg3: memref<64x3xf32, #tpu.memory_space<vmem>>, %arg4: memref<1x64x256xf32, #tpu.memory_space<vmem>>) attributes {dimension_semantics = [#tpu.dimension_semantics<parallel>], iteration_bounds = array<i64: 2>, scalar_prefetch = 0 : i64, scratch_operands = 0 : i64, tpu.core_type = #tpu.core_type<tc>, window_params = [{transform_indices = @transform_0, window_bounds = array<i64: 1, 4, 16, 16>}, {pipeline_mode = #tpu.pipeline_mode<synchronous>, transform_indices = @transform_1, window_bounds = array<i64: 64, 36>}, {pipeline_mode = #tpu.pipeline_mode<synchronous>, transform_indices = @transform_2, window_bounds = array<i64: 64, 3>}, {transform_indices = @transform_3, window_bounds = array<i64: 1, 64, 256>}]} {
    %c0 = arith.constant 0 : index
    %c0_0 = arith.constant 0 : index
    %c0_1 = arith.constant 0 : index
    %c0_2 = arith.constant 0 : index
    %0 = vector.load %arg1[%c0, %c0_0, %c0_1, %c0_2] : memref<1x4x16x16xf32, #tpu.memory_space<vmem>>, vector<1x4x16x16xf32>
    %1 = vector.shape_cast %0 : vector<1x4x16x16xf32> to vector<4x16x16xf32>
    %cst = arith.constant 0.000000e+00 : f32
    %2 = vector.broadcast %cst : f32 to vector<4x1x16xf32>
    %3 = tpu.concatenate %2, %1, %2 in 1 : vector<4x1x16xf32>, vector<4x16x16xf32>, vector<4x1x16xf32> -> vector<4x18x16xf32>
    %cst_3 = arith.constant 0.000000e+00 : f32
    %4 = vector.broadcast %cst_3 : f32 to vector<4x18x1xf32>
    %5 = tpu.concatenate %4, %3, %4 in 2 : vector<4x18x1xf32>, vector<4x18x16xf32>, vector<4x18x1xf32> -> vector<4x18x18xf32>
    %6 = vector.extract_strided_slice %5 {offsets = [0, 0, 0], sizes = [4, 16, 16], strides = [1, 1, 1]} : vector<4x18x18xf32> to vector<4x16x16xf32>
    %7 = vector.extract_strided_slice %5 {offsets = [0, 0, 1], sizes = [4, 16, 16], strides = [1, 1, 1]} : vector<4x18x18xf32> to vector<4x16x16xf32>
    %8 = vector.extract_strided_slice %5 {offsets = [0, 0, 2], sizes = [4, 16, 16], strides = [1, 1, 1]} : vector<4x18x18xf32> to vector<4x16x16xf32>
    %9 = vector.extract_strided_slice %5 {offsets = [0, 1, 0], sizes = [4, 16, 16], strides = [1, 1, 1]} : vector<4x18x18xf32> to vector<4x16x16xf32>
    %10 = vector.extract_strided_slice %5 {offsets = [0, 1, 1], sizes = [4, 16, 16], strides = [1, 1, 1]} : vector<4x18x18xf32> to vector<4x16x16xf32>
    %11 = vector.extract_strided_slice %5 {offsets = [0, 1, 2], sizes = [4, 16, 16], strides = [1, 1, 1]} : vector<4x18x18xf32> to vector<4x16x16xf32>
    %12 = vector.extract_strided_slice %5 {offsets = [0, 2, 0], sizes = [4, 16, 16], strides = [1, 1, 1]} : vector<4x18x18xf32> to vector<4x16x16xf32>
    %13 = vector.extract_strided_slice %5 {offsets = [0, 2, 1], sizes = [4, 16, 16], strides = [1, 1, 1]} : vector<4x18x18xf32> to vector<4x16x16xf32>
    %14 = vector.extract_strided_slice %5 {offsets = [0, 2, 2], sizes = [4, 16, 16], strides = [1, 1, 1]} : vector<4x18x18xf32> to vector<4x16x16xf32>
    %15 = tpu.concatenate %6, %7, %8, %9, %10, %11, %12, %13, %14 in 0 : vector<4x16x16xf32>, vector<4x16x16xf32>, vector<4x16x16xf32>, vector<4x16x16xf32>, vector<4x16x16xf32>, vector<4x16x16xf32>, vector<4x16x16xf32>, vector<4x16x16xf32>, vector<4x16x16xf32> -> vector<36x16x16xf32>
    %16 = vector.shape_cast %15 : vector<36x16x16xf32> to vector<36x256xf32>
    %17 = arith.truncf %16 : vector<36x256xf32> to vector<36x256xbf16>
    %c0_4 = arith.constant 0 : index
    %c0_5 = arith.constant 0 : index
    %18 = vector.load %arg2[%c0_4, %c0_5] : memref<64x36xbf16, #tpu.memory_space<vmem>>, vector<64x36xbf16>
    %cst_6 = arith.constant dense<0.000000e+00> : vector<64x256xf32>
    %19 = tpu.matmul %18, %17, %cst_6 {dimension_numbers = #tpu.dot_dimension_numbers<[1], [0], [0], [1], [0, 0, 1, 1], [], []>} : vector<64x36xbf16>, vector<36x256xbf16>, vector<64x256xf32> -> vector<64x256xf32>
    %c0_7 = arith.constant 0 : index
    %c0_8 = arith.constant 0 : index
    %20 = vector.load %arg3[%c0_7, %c0_8] : memref<64x3xf32, #tpu.memory_space<vmem>>, vector<64x1xf32>
    %c0_9 = arith.constant 0 : index
    %c1 = arith.constant 1 : index
    %21 = vector.load %arg3[%c0_9, %c1] : memref<64x3xf32, #tpu.memory_space<vmem>>, vector<64x1xf32>
    %c0_10 = arith.constant 0 : index
    %c2 = arith.constant 2 : index
    %22 = vector.load %arg3[%c0_10, %c2] : memref<64x3xf32, #tpu.memory_space<vmem>>, vector<64x1xf32>
    %cst_11 = arith.constant dense<0.000000e+00> : vector<64xf32>
    %23 = vector.multi_reduction <add>, %19, %cst_11 [1] : vector<64x256xf32> to vector<64xf32>
    %24 = vector.shape_cast %23 : vector<64xf32> to vector<64x1xf32>
    %25 = arith.mulf %19, %19 : vector<64x256xf32>
    %cst_12 = arith.constant dense<0.000000e+00> : vector<64xf32>
    %26 = vector.multi_reduction <add>, %25, %cst_12 [1] : vector<64x256xf32> to vector<64xf32>
    %27 = vector.shape_cast %26 : vector<64xf32> to vector<64x1xf32>
    %cst_13 = arith.constant 2.560000e+02 : f32
    %28 = vector.broadcast %cst_13 : f32 to vector<64x1xf32>
    %29 = arith.mulf %28, %20 : vector<64x1xf32>
    %30 = arith.addf %24, %29 : vector<64x1xf32>
    %cst_14 = arith.constant 2.000000e+00 : f32
    %31 = vector.broadcast %cst_14 : f32 to vector<64x1xf32>
    %32 = arith.mulf %31, %20 : vector<64x1xf32>
    %33 = arith.mulf %32, %24 : vector<64x1xf32>
    %34 = arith.addf %27, %33 : vector<64x1xf32>
    %35 = arith.mulf %20, %20 : vector<64x1xf32>
    %cst_15 = arith.constant 2.560000e+02 : f32
    %36 = vector.broadcast %cst_15 : f32 to vector<64x1xf32>
    %37 = arith.mulf %36, %35 : vector<64x1xf32>
    %38 = arith.addf %34, %37 : vector<64x1xf32>
    %cst_16 = arith.constant 3.906250e-03 : f32
    %39 = vector.broadcast %cst_16 : f32 to vector<64x1xf32>
    %40 = arith.mulf %30, %39 : vector<64x1xf32>
    %cst_17 = arith.constant 3.906250e-03 : f32
    %41 = vector.broadcast %cst_17 : f32 to vector<64x1xf32>
    %42 = arith.mulf %38, %41 : vector<64x1xf32>
    %43 = arith.mulf %40, %40 : vector<64x1xf32>
    %44 = arith.subf %42, %43 : vector<64x1xf32>
    %cst_18 = arith.constant 0.000000e+00 : f32
    %45 = vector.broadcast %cst_18 : f32 to vector<64x1xf32>
    %46 = arith.maximumf %44, %45 : vector<64x1xf32>
    %cst_19 = arith.constant 9.99999974E-6 : f32
    %47 = vector.broadcast %cst_19 : f32 to vector<64x1xf32>
    %48 = arith.addf %46, %47 : vector<64x1xf32>
    %49 = math.rsqrt %48 : vector<64x1xf32>
    %50 = arith.mulf %21, %49 : vector<64x1xf32>
    %51 = arith.subf %20, %40 : vector<64x1xf32>
    %52 = arith.mulf %51, %50 : vector<64x1xf32>
    %53 = arith.addf %52, %22 : vector<64x1xf32>
    %54 = vector.broadcast %50 : vector<64x1xf32> to vector<64x256xf32>
    %55 = arith.mulf %19, %54 : vector<64x256xf32>
    %56 = vector.broadcast %53 : vector<64x1xf32> to vector<64x256xf32>
    %57 = arith.addf %55, %56 : vector<64x256xf32>
    %cst_20 = arith.constant 0.000000e+00 : f32
    %58 = vector.broadcast %cst_20 : f32 to vector<64x256xf32>
    %59 = arith.maximumf %57, %58 : vector<64x256xf32>
    %c0_21 = arith.constant 0 : index
    %c0_22 = arith.constant 0 : index
    %c0_23 = arith.constant 0 : index
    %60 = vector.load %arg4[%c0_21, %c0_22, %c0_23] : memref<1x64x256xf32, #tpu.memory_space<vmem>>, vector<1x64x256xf32>
    %61 = vector.shape_cast %60 : vector<1x64x256xf32> to vector<64x256xf32>
    %62 = vector.shape_cast %59 : vector<64x256xf32> to vector<1x64x256xf32>
    tpu.vector_store %arg4[%c0_21, %c0_22, %c0_23], %62 {strides = array<i32>} : memref<1x64x256xf32, #tpu.memory_space<vmem>>, vector<1x64x256xf32>,
    return
  }
  func.func @transform_0(%arg0: i32) -> (i32, i32, i32, i32) {
    %c0_i32 = arith.constant 0 : i32
    %c0_i32_0 = arith.constant 0 : i32
    %c0_i32_1 = arith.constant 0 : i32
    %c0_i32_2 = arith.constant 0 : i32
    return %arg0, %c0_i32, %c0_i32_0, %c0_i32_1 : i32, i32, i32, i32
  }
  func.func @transform_1(%arg0: i32) -> (i32, i32) {
    %c0_i32 = arith.constant 0 : i32
    %c0_i32_0 = arith.constant 0 : i32
    %c0_i32_1 = arith.constant 0 : i32
    return %c0_i32, %c0_i32_0 : i32, i32
  }
  func.func @transform_2(%arg0: i32) -> (i32, i32) {
    %c0_i32 = arith.constant 0 : i32
    %c0_i32_0 = arith.constant 0 : i32
    %c0_i32_1 = arith.constant 0 : i32
    return %c0_i32, %c0_i32_0 : i32, i32
  }
  func.func @transform_3(%arg0: i32) -> (i32, i32, i32) {
    %c0_i32 = arith.constant 0 : i32
    %c0_i32_0 = arith.constant 0 : i32
    %c0_i32_1 = arith.constant 0 : i32
    return %arg0, %c0_i32, %c0_i32_0 : i32, i32, i32
  }
}

</mosaic_0001>

<llo_original>
// kernel: tpu_custom_call.1
$region0: #{tpu_custom_call.1}
  #allocation0 [shape = 'u32[]', space=smem, size = 0x4, offset = 0x4, fixed_abs, tag = 'smem constant byte address 0x4 - core index']
  #allocation1 [shape = 'u32[144,128]{1,0:T(1,128)}', space=vmem, size = 0x12000, scoped, tag = 'internal scratch']
  %s0 = inlined_call_operand.hbm [shape: f32[2,4,16,16], index: 0, kind: input, shape index: {}]
  %s1 = inlined_call_operand.vmem [shape: bf16[64,36], index: 1, kind: input, shape index: {}]
  %s2 = inlined_call_operand.vmem [shape: f32[64,3], index: 2, kind: input, shape index: {}]
  %s3 = inlined_call_operand.hbm [shape: f32[2,64,256], index: 3, kind: output, shape index: {}]
  %s4 = sld [smem:[#allocation0]]
  $region49: #{tpu_custom_call.1} parent=0
    _
  %s6 = ssub.s32 1, %s4
  %s7 = scalar_select 0, %s6, %s4
  $region1: #{tpu_custom_call.1} parent=0
    #allocation2 [shape = 'u8[65536]{0}', space=vmem, size = 0x10000, scoped, tag = 'input window, operand 0']
    #allocation3 [shape = 's32[2]{0}', space=sflag, size = 0x8, scoped, tag = 'scoped memory for tpu_custom_call.1']
    #allocation4 [shape = 's32[2]{0}', space=sflag, size = 0x8, scoped, tag = 'scoped memory for tpu_custom_call.1']
    #allocation5 [shape = 'u8[131072]{0}', space=vmem, size = 0x20000, scoped, tag = 'output window, operand 0']
    %8 = vsyncpa [#allocation3], 0
    %s9 = scalar_lea.sflag [#allocation3], 1
    %10 = vsyncpa %s9, 0
    %11 = vsyncpa [#allocation4], 0
    %s12 = scalar_lea.sflag [#allocation4], 1
    %13 = vsyncpa %s12, 0
    loop: start=0, step=1, limit=4
    $region2: #{tpu_custom_call.1} parent=1 // loop_pre_header
      _
    $region3: #{tpu_custom_call.1} parent=1 // loop_header
      %s15 = sphi 0, %s19
      %p16 = scmp.ge.s32.totalorder %s15, 4
      %s25 = sphi 0, %s27
      %s28 = sphi 0, %s25
      %s29 = sphi 0, %s28
      %s45 = sphi 0, %s29
      %s49 = sphi 0, %s49
      %s51 = sphi 0, %s49
      %s52 = sphi 0, %s51
      %s66 = sphi 0, %s52
      %s70 = sphi 0, %s70
      %s72 = sphi 0, %s70
      %s73 = sphi 0, %s72
      %s87 = sphi 0, %s73
      %s93 = sphi 0, %s95
      %s96 = sphi 0, %s93
      %s97 = sphi 0, %s96
      %s113 = sphi 0, %s97
    $region4: #{tpu_custom_call.1} parent=1 // loop_header_branch
      %18 = sbr.rel (%p16) target = $region8
    $region5: #{tpu_custom_call.1} parent=1 // loop_body
      %s20 = ssub.s32 %s15, 1
      %s21 = ssub.s32 %s15, 2
      %s22 = sadd.s32 %s15, 1
      %s23 = ssub.s32 %s15, %s22
      %p24 = scmp.eq.s32.totalorder %s23, 0
      %s26 = sadd.s32 %s25, 1
      %s27 = scalar_select %p24, %s25, %s26
      %p30 = pneg %p24
      %p31 = scmp.eq.s32.totalorder %s15, 1
      %p32 = por %p30, %p31
      %p33 = scmp.ne.s32.totalorder %s25, %s28
      %p34 = scmp.eq.s32.totalorder %s15, 0
      %p35 = por %p33, %p34
      %p36 = scmp.ne.s32.totalorder %s25, %s28
      %p37 = scmp.eq.s32.totalorder %s20, 1
      %p38 = por %p36, %p37
      %p39 = scmp.ne.s32.totalorder %s28, %s29
      %p40 = scmp.eq.s32.totalorder %s20, 0
      %p41 = por %p39, %p40
      %p42 = scmp.ne.s32.totalorder %s28, %s29
      %p43 = scmp.eq.s32.totalorder %s21, 1
      %p44 = por %p42, %p43
      %p46 = scmp.ne.s32.totalorder %s29, %s45
      %p47 = scmp.eq.s32.totalorder %s21, 0
      %p48 = por %p46, %p47
      %s50 = sadd.s32 %s49, 1
      %p53 = scmp.eq.s32.totalorder %s15, 1
      %p54 = scmp.ne.s32.totalorder %s49, %s51
      %p55 = scmp.eq.s32.totalorder %s15, 0
      %p56 = por %p54, %p55
      %p57 = scmp.ne.s32.totalorder %s49, %s51
      %p58 = scmp.eq.s32.totalorder %s20, 1
      %p59 = por %p57, %p58
      %p60 = scmp.ne.s32.totalorder %s51, %s52
      %p61 = scmp.eq.s32.totalorder %s20, 0
      %p62 = por %p60, %p61
      %p63 = scmp.ne.s32.totalorder %s51, %s52
      %p64 = scmp.eq.s32.totalorder %s21, 1
      %p65 = por %p63, %p64
      %p67 = scmp.ne.s32.totalorder %s52, %s66
      %p68 = scmp.eq.s32.totalorder %s21, 0
      %p69 = por %p67, %p68
      %s71 = sadd.s32 %s70, 1
      %p74 = scmp.eq.s32.totalorder %s15, 1
      %p75 = scmp.ne.s32.totalorder %s70, %s72
      %p76 = scmp.eq.s32.totalorder %s15, 0
      %p77 = por %p75, %p76
      %p78 = scmp.ne.s32.totalorder %s70, %s72
      %p79 = scmp.eq.s32.totalorder %s20, 1
      %p80 = por %p78, %p79
      %p81 = scmp.ne.s32.totalorder %s72, %s73
      %p82 = scmp.eq.s32.totalorder %s20, 0
      %p83 = por %p81, %p82
      %p84 = scmp.ne.s32.totalorder %s72, %s73
      %p85 = scmp.eq.s32.totalorder %s21, 1
      %p86 = por %p84, %p85
      %p88 = scmp.ne.s32.totalorder %s73, %s87
      %p89 = scmp.eq.s32.totalorder %s21, 0
      %p90 = por %p88, %p89
      %s91 = ssub.s32 %s15, %s22
      %p92 = scmp.eq.s32.totalorder %s91, 0
      %s94 = sadd.s32 %s93, 1
      %s95 = scalar_select %p92, %s93, %s94
      %p98 = pneg %p92
      %p99 = scmp.eq.s32.totalorder %s15, 1
      %p100 = por %p98, %p99
      %p101 = scmp.ne.s32.totalorder %s93, %s96
      %p102 = scmp.eq.s32.totalorder %s15, 0
      %p103 = por %p101, %p102
      %p104 = scmp.ne.s32.totalorder %s93, %s96
      %p105 = scmp.eq.s32.totalorder %s20, 1
      %p106 = por %p104, %p105
      %p107 = scmp.ne.s32.totalorder %s96, %s97
      %p108 = scmp.eq.s32.totalorder %s20, 0
      %p109 = por %p107, %p108
      %p110 = scmp.ne.s32.totalorder %s96, %s97
      %p111 = scmp.eq.s32.totalorder %s21, 1
      %p112 = por %p110, %p111
      %p114 = scmp.ne.s32.totalorder %s97, %s113
      %p115 = scmp.eq.s32.totalorder %s21, 0
      %p116 = por %p114, %p115
      %p117 = scmp.le.s32.totalorder 1, %s15
      %p118 = scmp.lt.s32.totalorder %s15, 3
      %p119 = pnand %p117, %p118
      %p120 = pneg %p119
      // Predicated region
      $region9: #{tpu_custom_call.1} parent=5 // pred_check
        _
      $region10: #{tpu_custom_call.1} parent=5 // pred_check_branch
        %122 = sbr.rel (%p119) target = $region12
      $region11: #{tpu_custom_call.1} parent=5 // pred_region
        %s123 = ssub.s32 %s15, 1
        // Predicated region
        $region13: #{tpu_custom_call.1} parent=11 // pred_check
          %p124 = pneg %p62
        $region14: #{tpu_custom_call.1} parent=11 // pred_check_branch
          %126 = sbr.rel (%p124) target = $region16
        $region15: #{tpu_custom_call.1} parent=11 // pred_region
          _
        $region16: #{tpu_custom_call.1} parent=11 // pred_fallthru
          _
        // Predicated region
        $region17: #{tpu_custom_call.1} parent=11 // pred_check
          %p127 = pneg %p83
        $region18: #{tpu_custom_call.1} parent=11 // pred_check_branch
          %129 = sbr.rel (%p127) target = $region20
        $region19: #{tpu_custom_call.1} parent=11 // pred_region
          _
        $region20: #{tpu_custom_call.1} parent=11 // pred_fallthru
          _
      $region12: #{tpu_custom_call.1} parent=5 // pred_fallthru
        _
      %p130 = scmp.lt.s32.totalorder %s15, 2
      // Predicated region
      $region21: #{tpu_custom_call.1} parent=5 // pred_check
        %p131 = pneg %p130
      $region22: #{tpu_custom_call.1} parent=5 // pred_check_branch
        %133 = sbr.rel (%p131) target = $region24
      $region23: #{tpu_custom_call.1} parent=5 // pred_region
        // Predicated region
        $region25: #{tpu_custom_call.1} parent=23 // pred_check
          %p134 = pneg %p35
        $region26: #{tpu_custom_call.1} parent=23 // pred_check_branch
          %136 = sbr.rel (%p134) target = $region28
        $region27: #{tpu_custom_call.1} parent=23 // pred_region
          %s137 = sand.u32 %s25, 1
          %s138 = scalar_lea.sflag [#allocation3], %s137
          %s139 = sand.u32 %s25, 1
          %s140 = smul.addr %s139, 64
          %s141 = scalar_lea.vmem [#allocation2], %s140
          %s143 = ssub.s32 1024, 1024
          %144 = vsyncadd %s138, %s143
          %s145 = smul.addr %s15, 8
          %s146 = smul.addr %s145, 128
          %s147 = scalar_lea.hbm %s0, %s146
          %s148 = sshll.u32 %s141, 4
          %s149 = int_to_ptr.vmem [resolvable:$true] %s148
          %154 = dma.hbm_to_vmem [thread:$0]  %s147, 1024, %s149, %s138, 128, 128, 8
        $region28: #{tpu_custom_call.1} parent=23 // pred_fallthru
          _
      $region24: #{tpu_custom_call.1} parent=5 // pred_fallthru
        _
      %p155 = scmp.le.s32.totalorder 1, %s15
      %p156 = scmp.lt.s32.totalorder %s15, 3
      %p157 = pnand %p155, %p156
      %p158 = pneg %p157
      // Predicated region
      $region29: #{tpu_custom_call.1} parent=5 // pred_check
        _
      $region30: #{tpu_custom_call.1} parent=5 // pred_check_branch
        %160 = sbr.rel (%p157) target = $region32
      $region31: #{tpu_custom_call.1} parent=5 // pred_region
        %s161 = ssub.s32 %s15, 1
        %s162 = sand.u32 %s28, 1
        %s163 = scalar_lea.sflag [#allocation3], %s162
        %s164 = sand.u32 %s28, 1
        %s165 = smul.addr %s164, 64
        %s166 = scalar_lea.vmem [#allocation2], %s165
        // Predicated region
        $region33: #{tpu_custom_call.1} parent=31 // pred_check
          %p167 = pneg %p41
        $region34: #{tpu_custom_call.1} parent=31 // pred_check_branch
          %169 = sbr.rel (%p167) target = $region36
        $region35: #{tpu_custom_call.1} parent=31 // pred_region
          %170 = dma.done %s163, 1024
        $region36: #{tpu_custom_call.1} parent=31 // pred_fallthru
          _
        %s171 = sand.u32 %s28, 1
        %s172 = scalar_lea.sflag [#allocation3], %s171
        %s173 = sand.u32 %s28, 1
        %s174 = smul.addr %s173, 64
        %s175 = scalar_lea.vmem [#allocation2], %s174
        %p176 = pneg %p41
        %p177 = pneg %p38
        %p178 = pneg %p62
        %p179 = pneg %p59
        %p180 = pneg %p83
        %p181 = pneg %p80
        %p182 = pneg %p109
        %p183 = pneg %p106
        %s184 = sand.u32 %s96, 1
        %s185 = scalar_lea.sflag [#allocation4], %s184
        %s186 = sand.u32 %s96, 1
        %s187 = smul.addr %s186, 128
        %s188 = scalar_lea.vmem [#allocation5], %s187
        %v190 = vld [vmem:[%s166] sm:$0xff]
        %v191 = vld [vmem:[%s166 + $0x8] sm:$0xff]
        %v192 = vld [vmem:[%s166 + $0x10] sm:$0xff]
        %v193 = vld [vmem:[%s166 + $0x18] sm:$0xff]
        %v194 = vld [vmem:[%s166 + $0x20] sm:$0xff]
        %v195 = vld [vmem:[%s166 + $0x28] sm:$0xff]
        %v196 = vld [vmem:[%s166 + $0x30] sm:$0xff]
        %v197 = vld [vmem:[%s166 + $0x38] sm:$0xff]
        %vm206 = vcmask 1040384
        %v207 = vrot.slane %v190, 7
        %v208 = vrot.slane %v191, 7
        %v209 = vsel %vm206, %v207, %v208
        %v210 = vrot.slane %v192, 7
        %v211 = vrot.slane %v193, 7
        %v212 = vsel %vm206, %v210, %v211
        %v213 = vrot.slane %v194, 7
        %v214 = vrot.slane %v195, 7
        %v215 = vsel %vm206, %v213, %v214
        %v216 = vrot.slane %v196, 7
        %v217 = vrot.slane %v197, 7
        %v218 = vsel %vm206, %v216, %v217
        %v227 = vsel %vm206, 0.0, %v207
        %v228 = vsel %vm206, 0.0, %v210
        %v229 = vsel %vm206, 0.0, %v213
        %v230 = vsel %vm206, 0.0, %v216
        %v231 = vsel %vm206, %v208, 0.0
        %v232 = vsel %vm206, %v211, 0.0
        %v233 = vsel %vm206, %v214, 0.0
        %v234 = vsel %vm206, %v217, 0.0
        %243 = vrot.lane.b32.xlu0 %v227, 1
        %v244 = vpop.permute.xlu0 %243
        %245 = vrot.lane.b32.xlu0 %v209, 1
        %v246 = vpop.permute.xlu0 %245
        %247 = vrot.lane.b32.xlu0 %v231, 1
        %v248 = vpop.permute.xlu0 %247
        %249 = vrot.lane.b32.xlu0 %v228, 1
        %v250 = vpop.permute.xlu0 %249
        %251 = vrot.lane.b32.xlu0 %v212, 1
        %v252 = vpop.permute.xlu0 %251
        %253 = vrot.lane.b32.xlu0 %v232, 1
        %v254 = vpop.permute.xlu0 %253
        %255 = vrot.lane.b32.xlu0 %v229, 1
        %v256 = vpop.permute.xlu0 %255
        %257 = vrot.lane.b32.xlu0 %v215, 1
        %v258 = vpop.permute.xlu0 %257
        %259 = vrot.lane.b32.xlu0 %v233, 1
        %v260 = vpop.permute.xlu0 %259
        %261 = vrot.lane.b32.xlu0 %v230, 1
        %v262 = vpop.permute.xlu0 %261
        %263 = vrot.lane.b32.xlu0 %v218, 1
        %v264 = vpop.permute.xlu0 %263
        %265 = vrot.lane.b32.xlu0 %v234, 1
        %v266 = vpop.permute.xlu0 %265
        %vm279 = vcmask 7168
        %v280 = vsel %vm279, 0.0, %v244
        %v281 = vsel %vm279, 0.0, %v246
        %v282 = vsel %vm279, 0.0, %v248
        %v283 = vsel %vm279, 0.0, %v250
        %v284 = vsel %vm279, 0.0, %v252
        %v285 = vsel %vm279, 0.0, %v254
        %v286 = vsel %vm279, 0.0, %v256
        %v287 = vsel %vm279, 0.0, %v258
        %v288 = vsel %vm279, 0.0, %v260
        %v289 = vsel %vm279, 0.0, %v262
        %v290 = vsel %vm279, 0.0, %v264
        %v291 = vsel %vm279, 0.0, %v266
        %vm292 = vcmask 138240
        %v293 = vsel %vm292, %v280, 0.0
        %v294 = vsel %vm292, %v281, 0.0
        %v295 = vsel %vm292, %v282, 0.0
        %v296 = vsel %vm292, %v283, 0.0
        %v297 = vsel %vm292, %v284, 0.0
        %v298 = vsel %vm292, %v285, 0.0
        %v299 = vsel %vm292, %v286, 0.0
        %v300 = vsel %vm292, %v287, 0.0
        %v301 = vsel %vm292, %v288, 0.0
        %v302 = vsel %vm292, %v289, 0.0
        %v303 = vsel %vm292, %v290, 0.0
        %v304 = vsel %vm292, %v291, 0.0
        %313 = vrot.lane.b32.xlu0 %v293, 127
        %v314 = vpop.permute.xlu0 %313
        %315 = vrot.lane.b32.xlu0 %v294, 127
        %v316 = vpop.permute.xlu0 %315
        %317 = vrot.lane.b32.xlu0 %v296, 127
        %v318 = vpop.permute.xlu0 %317
        %319 = vrot.lane.b32.xlu0 %v297, 127
        %v320 = vpop.permute.xlu0 %319
        %321 = vrot.lane.b32.xlu0 %v299, 127
        %v322 = vpop.permute.xlu0 %321
        %323 = vrot.lane.b32.xlu0 %v300, 127
        %v324 = vpop.permute.xlu0 %323
        %325 = vrot.lane.b32.xlu0 %v302, 127
        %v326 = vpop.permute.xlu0 %325
        %327 = vrot.lane.b32.xlu0 %v303, 127
        %v328 = vpop.permute.xlu0 %327
        %337 = vrot.lane.b32.xlu0 %v293, 126
        %v338 = vpop.permute.xlu0 %337
        %339 = vrot.lane.b32.xlu0 %v294, 126
        %v340 = vpop.permute.xlu0 %339
        %341 = vrot.lane.b32.xlu0 %v296, 126
        %v342 = vpop.permute.xlu0 %341
        %343 = vrot.lane.b32.xlu0 %v297, 126
        %v344 = vpop.permute.xlu0 %343
        %345 = vrot.lane.b32.xlu0 %v299, 126
        %v346 = vpop.permute.xlu0 %345
        %347 = vrot.lane.b32.xlu0 %v300, 126
        %v348 = vpop.permute.xlu0 %347
        %349 = vrot.lane.b32.xlu0 %v302, 126
        %v350 = vpop.permute.xlu0 %349
        %351 = vrot.lane.b32.xlu0 %v303, 126
        %v352 = vpop.permute.xlu0 %351
        %vm365 = vcmask 1046528
        %v366 = vrot.slane %v293, 1
        %v367 = vrot.slane %v294, 1
        %v368 = vsel %vm365, %v366, %v367
        %v369 = vrot.slane %v295, 1
        %v370 = vsel %vm365, %v367, %v369
        %v371 = vrot.slane %v296, 1
        %v372 = vrot.slane %v297, 1
        %v373 = vsel %vm365, %v371, %v372
        %v374 = vrot.slane %v298, 1
        %v375 = vsel %vm365, %v372, %v374
        %v376 = vrot.slane %v299, 1
        %v377 = vrot.slane %v300, 1
        %v378 = vsel %vm365, %v376, %v377
        %v379 = vrot.slane %v301, 1
        %v380 = vsel %vm365, %v377, %v379
        %v381 = vrot.slane %v302, 1
        %v382 = vrot.slane %v303, 1
        %v383 = vsel %vm365, %v381, %v382
        %v384 = vrot.slane %v304, 1
        %v385 = vsel %vm365, %v382, %v384
        %394 = vrot.lane.b32.xlu0 %v368, 127
        %v395 = vpop.permute.xlu0 %394
        %396 = vrot.lane.b32.xlu0 %v370, 127
        %v397 = vpop.permute.xlu0 %396
        %398 = vrot.lane.b32.xlu0 %v373, 127
        %v399 = vpop.permute.xlu0 %398
        %400 = vrot.lane.b32.xlu0 %v375, 127
        %v401 = vpop.permute.xlu0 %400
        %402 = vrot.lane.b32.xlu0 %v378, 127
        %v403 = vpop.permute.xlu0 %402
        %404 = vrot.lane.b32.xlu0 %v380, 127
        %v405 = vpop.permute.xlu0 %404
        %406 = vrot.lane.b32.xlu0 %v383, 127
        %v407 = vpop.permute.xlu0 %406
        %408 = vrot.lane.b32.xlu0 %v385, 127
        %v409 = vpop.permute.xlu0 %408
        %418 = vrot.lane.b32.xlu0 %v368, 126
        %v419 = vpop.permute.xlu0 %418
        %420 = vrot.lane.b32.xlu0 %v370, 126
        %v421 = vpop.permute.xlu0 %420
        %422 = vrot.lane.b32.xlu0 %v373, 126
        %v423 = vpop.permute.xlu0 %422
        %424 = vrot.lane.b32.xlu0 %v375, 126
        %v425 = vpop.permute.xlu0 %424
        %426 = vrot.lane.b32.xlu0 %v378, 126
        %v427 = vpop.permute.xlu0 %426
        %428 = vrot.lane.b32.xlu0 %v380, 126
        %v429 = vpop.permute.xlu0 %428
        %430 = vrot.lane.b32.xlu0 %v383, 126
        %v431 = vpop.permute.xlu0 %430
        %432 = vrot.lane.b32.xlu0 %v385, 126
        %v433 = vpop.permute.xlu0 %432
        %vm442 = vcmask 1045504
        %v443 = vrot.slane %v293, 2
        %v444 = vrot.slane %v294, 2
        %v445 = vsel %vm442, %v443, %v444
        %v446 = vrot.slane %v295, 2
        %v447 = vsel %vm442, %v444, %v446
        %v448 = vrot.slane %v296, 2
        %v449 = vrot.slane %v297, 2
        %v450 = vsel %vm442, %v448, %v449
        %v451 = vrot.slane %v298, 2
        %v452 = vsel %vm442, %v449, %v451
        %v453 = vrot.slane %v299, 2
        %v454 = vrot.slane %v300, 2
        %v455 = vsel %vm442, %v453, %v454
        %v456 = vrot.slane %v301, 2
        %v457 = vsel %vm442, %v454, %v456
        %v458 = vrot.slane %v302, 2
        %v459 = vrot.slane %v303, 2
        %v460 = vsel %vm442, %v458, %v459
        %v461 = vrot.slane %v304, 2
        %v462 = vsel %vm442, %v459, %v461
        %471 = vrot.lane.b32.xlu0 %v445, 127
        %v472 = vpop.permute.xlu0 %471
        %473 = vrot.lane.b32.xlu0 %v447, 127
        %v474 = vpop.permute.xlu0 %473
        %475 = vrot.lane.b32.xlu0 %v450, 127
        %v476 = vpop.permute.xlu0 %475
        %477 = vrot.lane.b32.xlu0 %v452, 127
        %v478 = vpop.permute.xlu0 %477
        %479 = vrot.lane.b32.xlu0 %v455, 127
        %v480 = vpop.permute.xlu0 %479
        %481 = vrot.lane.b32.xlu0 %v457, 127
        %v482 = vpop.permute.xlu0 %481
        %483 = vrot.lane.b32.xlu0 %v460, 127
        %v484 = vpop.permute.xlu0 %483
        %485 = vrot.lane.b32.xlu0 %v462, 127
        %v486 = vpop.permute.xlu0 %485
        %495 = vrot.lane.b32.xlu0 %v445, 126
        %v496 = vpop.permute.xlu0 %495
        %497 = vrot.lane.b32.xlu0 %v447, 126
        %v498 = vpop.permute.xlu0 %497
        %499 = vrot.lane.b32.xlu0 %v450, 126
        %v500 = vpop.permute.xlu0 %499
        %501 = vrot.lane.b32.xlu0 %v452, 126
        %v502 = vpop.permute.xlu0 %501
        %503 = vrot.lane.b32.xlu0 %v455, 126
        %v504 = vpop.permute.xlu0 %503
        %505 = vrot.lane.b32.xlu0 %v457, 126
        %v506 = vpop.permute.xlu0 %505
        %507 = vrot.lane.b32.xlu0 %v460, 126
        %v508 = vpop.permute.xlu0 %507
        %509 = vrot.lane.b32.xlu0 %v462, 126
        %v510 = vpop.permute.xlu0 %509
        %v519 = vcombine.low %v293, %v299
        %v520 = vcombine.high %v293, %v299
        %v522 = vunpack.c.l.s4 1983009808
        %v523 = vunpack.c.0.s8 %v522
        %v524 = vlaneseq
        %v525 = vshrl.u32 %v524, 7
        %v526 = vsub.s32 %v523, %v525
        %v527 = vrot.slane %v519, %v526
        %v529 = vunpack.c.l.s4 1983009808
        %v530 = vunpack.c.0.s8 %v529
        %v531 = vlaneseq
        %v532 = vshrl.u32 %v531, 7
        %v533 = vsub.s32 %v530, %v532
        %v534 = vrot.slane %v520, %v533
        %v535 = vcombine.low %v296, %v302
        %v536 = vcombine.high %v296, %v302
        %v538 = vunpack.c.l.s4 1983009808
        %v539 = vunpack.c.0.s8 %v538
        %v540 = vlaneseq
        %v541 = vshrl.u32 %v540, 7
        %v542 = vsub.s32 %v539, %v541
        %v543 = vrot.slane %v535, %v542
        %v545 = vunpack.c.l.s4 1983009808
        %v546 = vunpack.c.0.s8 %v545
        %v547 = vlaneseq
        %v548 = vshrl.u32 %v547, 7
        %v549 = vsub.s32 %v546, %v548
        %v550 = vrot.slane %v536, %v549
        %v551 = vcombine.low %v314, %v322
        %v552 = vcombine.high %v314, %v322
        %v554 = vunpack.c.l.s4 1983009808
        %v555 = vunpack.c.0.s8 %v554
        %v556 = vlaneseq
        %v557 = vshrl.u32 %v556, 7
        %v558 = vsub.s32 %v555, %v557
        %v559 = vrot.slane %v551, %v558
        %v561 = vunpack.c.l.s4 1983009808
        %v562 = vunpack.c.0.s8 %v561
        %v563 = vlaneseq
        %v564 = vshrl.u32 %v563, 7
        %v565 = vsub.s32 %v562, %v564
        %v566 = vrot.slane %v552, %v565
        %v567 = vcombine.low %v318, %v326
        %v568 = vcombine.high %v318, %v326
        %v570 = vunpack.c.l.s4 1983009808
        %v571 = vunpack.c.0.s8 %v570
        %v572 = vlaneseq
        %v573 = vshrl.u32 %v572, 7
        %v574 = vsub.s32 %v571, %v573
        %v575 = vrot.slane %v567, %v574
        %v577 = vunpack.c.l.s4 1983009808
        %v578 = vunpack.c.0.s8 %v577
        %v579 = vlaneseq
        %v580 = vshrl.u32 %v579, 7
        %v581 = vsub.s32 %v578, %v580
        %v582 = vrot.slane %v568, %v581
        %v583 = vcombine.low %v527, %v543
        %v584 = vcombine.high %v527, %v543
        %v586 = vunpack.c.l.s4 1934713408
        %v587 = vunpack.c.0.s8 %v586
        %v588 = vlaneseq
        %v589 = vshrl.u32 %v588, 7
        %v590 = vsub.s32 %v587, %v589
        %v591 = vrot.slane %v583, %v590
        %v593 = vunpack.c.l.s4 1934713408
        %v594 = vunpack.c.0.s8 %v593
        %v595 = vlaneseq
        %v596 = vshrl.u32 %v595, 7
        %v597 = vsub.s32 %v594, %v596
        %v598 = vrot.slane %v584, %v597
        %v599 = vcombine.low %v534, %v550
        %v600 = vcombine.high %v534, %v550
        %v602 = vunpack.c.l.s4 1934713408
        %v603 = vunpack.c.0.s8 %v602
        %v604 = vlaneseq
        %v605 = vshrl.u32 %v604, 7
        %v606 = vsub.s32 %v603, %v605
        %v607 = vrot.slane %v599, %v606
        %v609 = vunpack.c.l.s4 1934713408
        %v610 = vunpack.c.0.s8 %v609
        %v611 = vlaneseq
        %v612 = vshrl.u32 %v611, 7
        %v613 = vsub.s32 %v610, %v612
        %v614 = vrot.slane %v600, %v613
        %v615 = vcombine.low %v559, %v575
        %v616 = vcombine.high %v559, %v575
        %v618 = vunpack.c.l.s4 1934713408
        %v619 = vunpack.c.0.s8 %v618
        %v620 = vlaneseq
        %v621 = vshrl.u32 %v620, 7
        %v622 = vsub.s32 %v619, %v621
        %v623 = vrot.slane %v615, %v622
        %v625 = vunpack.c.l.s4 1934713408
        %v626 = vunpack.c.0.s8 %v625
        %v627 = vlaneseq
        %v628 = vshrl.u32 %v627, 7
        %v629 = vsub.s32 %v626, %v628
        %v630 = vrot.slane %v616, %v629
        %v631 = vcombine.low %v566, %v582
        %v632 = vcombine.high %v566, %v582
        %v634 = vunpack.c.l.s4 1934713408
        %v635 = vunpack.c.0.s8 %v634
        %v636 = vlaneseq
        %v637 = vshrl.u32 %v636, 7
        %v638 = vsub.s32 %v635, %v637
        %v639 = vrot.slane %v631, %v638
        %v641 = vunpack.c.l.s4 1934713408
        %v642 = vunpack.c.0.s8 %v641
        %v643 = vlaneseq
        %v644 = vshrl.u32 %v643, 7
        %v645 = vsub.s32 %v642, %v644
        %v646 = vrot.slane %v632, %v645
        %v647 = vcombine.low %v591, %v623
        %v648 = vcombine.high %v591, %v623
        %v649 = vcombine.low %v598, %v630
        %v650 = vcombine.high %v598, %v630
        %v651 = vcombine.low %v607, %v639
        %v652 = vcombine.high %v607, %v639
        %v653 = vcombine.low %v614, %v646
        %v654 = vcombine.high %v614, %v646
        %v655 = vcombine.low %v338, %v346
        %v656 = vcombine.high %v338, %v346
        %v658 = vunpack.c.l.s4 1983009808
        %v659 = vunpack.c.0.s8 %v658
        %v660 = vlaneseq
        %v661 = vshrl.u32 %v660, 7
        %v662 = vsub.s32 %v659, %v661
        %v663 = vrot.slane %v655, %v662
        %v665 = vunpack.c.l.s4 1983009808
        %v666 = vunpack.c.0.s8 %v665
        %v667 = vlaneseq
        %v668 = vshrl.u32 %v667, 7
        %v669 = vsub.s32 %v666, %v668
        %v670 = vrot.slane %v656, %v669
        %v671 = vcombine.low %v342, %v350
        %v672 = vcombine.high %v342, %v350
        %v674 = vunpack.c.l.s4 1983009808
        %v675 = vunpack.c.0.s8 %v674
        %v676 = vlaneseq
        %v677 = vshrl.u32 %v676, 7
        %v678 = vsub.s32 %v675, %v677
        %v679 = vrot.slane %v671, %v678
        %v681 = vunpack.c.l.s4 1983009808
        %v682 = vunpack.c.0.s8 %v681
        %v683 = vlaneseq
        %v684 = vshrl.u32 %v683, 7
        %v685 = vsub.s32 %v682, %v684
        %v686 = vrot.slane %v672, %v685
        %v687 = vcombine.low %v368, %v378
        %v688 = vcombine.high %v368, %v378
        %v690 = vunpack.c.l.s4 1983009808
        %v691 = vunpack.c.0.s8 %v690
        %v692 = vlaneseq
        %v693 = vshrl.u32 %v692, 7
        %v694 = vsub.s32 %v691, %v693
        %v695 = vrot.slane %v687, %v694
        %v697 = vunpack.c.l.s4 1983009808
        %v698 = vunpack.c.0.s8 %v697
        %v699 = vlaneseq
        %v700 = vshrl.u32 %v699, 7
        %v701 = vsub.s32 %v698, %v700
        %v702 = vrot.slane %v688, %v701
        %v703 = vcombine.low %v373, %v383
        %v704 = vcombine.high %v373, %v383
        %v706 = vunpack.c.l.s4 1983009808
        %v707 = vunpack.c.0.s8 %v706
        %v708 = vlaneseq
        %v709 = vshrl.u32 %v708, 7
        %v710 = vsub.s32 %v707, %v709
        %v711 = vrot.slane %v703, %v710
        %v713 = vunpack.c.l.s4 1983009808
        %v714 = vunpack.c.0.s8 %v713
        %v715 = vlaneseq
        %v716 = vshrl.u32 %v715, 7
        %v717 = vsub.s32 %v714, %v716
        %v718 = vrot.slane %v704, %v717
        %v719 = vcombine.low %v663, %v679
        %v720 = vcombine.high %v663, %v679
        %v722 = vunpack.c.l.s4 1934713408
        %v723 = vunpack.c.0.s8 %v722
        %v724 = vlaneseq
        %v725 = vshrl.u32 %v724, 7
        %v726 = vsub.s32 %v723, %v725
        %v727 = vrot.slane %v719, %v726
        %v729 = vunpack.c.l.s4 1934713408
        %v730 = vunpack.c.0.s8 %v729
        %v731 = vlaneseq
        %v732 = vshrl.u32 %v731, 7
        %v733 = vsub.s32 %v730, %v732
        %v734 = vrot.slane %v720, %v733
        %v735 = vcombine.low %v670, %v686
        %v736 = vcombine.high %v670, %v686
        %v738 = vunpack.c.l.s4 1934713408
        %v739 = vunpack.c.0.s8 %v738
        %v740 = vlaneseq
        %v741 = vshrl.u32 %v740, 7
        %v742 = vsub.s32 %v739, %v741
        %v743 = vrot.slane %v735, %v742
        %v745 = vunpack.c.l.s4 1934713408
        %v746 = vunpack.c.0.s8 %v745
        %v747 = vlaneseq
        %v748 = vshrl.u32 %v747, 7
        %v749 = vsub.s32 %v746, %v748
        %v750 = vrot.slane %v736, %v749
        %v751 = vcombine.low %v695, %v711
        %v752 = vcombine.high %v695, %v711
        %v754 = vunpack.c.l.s4 1934713408
        %v755 = vunpack.c.0.s8 %v754
        %v756 = vlaneseq
        %v757 = vshrl.u32 %v756, 7
        %v758 = vsub.s32 %v755, %v757
        %v759 = vrot.slane %v751, %v758
        %v761 = vunpack.c.l.s4 1934713408
        %v762 = vunpack.c.0.s8 %v761
        %v763 = vlaneseq
        %v764 = vshrl.u32 %v763, 7
        %v765 = vsub.s32 %v762, %v764
        %v766 = vrot.slane %v752, %v765
        %v767 = vcombine.low %v702, %v718
        %v768 = vcombine.high %v702, %v718
        %v770 = vunpack.c.l.s4 1934713408
        %v771 = vunpack.c.0.s8 %v770
        %v772 = vlaneseq
        %v773 = vshrl.u32 %v772, 7
        %v774 = vsub.s32 %v771, %v773
        %v775 = vrot.slane %v767, %v774
        %v777 = vunpack.c.l.s4 1934713408
        %v778 = vunpack.c.0.s8 %v777
        %v779 = vlaneseq
        %v780 = vshrl.u32 %v779, 7
        %v781 = vsub.s32 %v778, %v780
        %v782 = vrot.slane %v768, %v781
        %v783 = vcombine.low %v727, %v759
        %v784 = vcombine.high %v727, %v759
        %v785 = vcombine.low %v734, %v766
        %v786 = vcombine.high %v734, %v766
        %v787 = vcombine.low %v743, %v775
        %v788 = vcombine.high %v743, %v775
        %v789 = vcombine.low %v750, %v782
        %v790 = vcombine.high %v750, %v782
        %v791 = vcombine.low %v395, %v403
        %v792 = vcombine.high %v395, %v403
        %v794 = vunpack.c.l.s4 1983009808
        %v795 = vunpack.c.0.s8 %v794
        %v796 = vlaneseq
        %v797 = vshrl.u32 %v796, 7
        %v798 = vsub.s32 %v795, %v797
        %v799 = vrot.slane %v791, %v798
        %v801 = vunpack.c.l.s4 1983009808
        %v802 = vunpack.c.0.s8 %v801
        %v803 = vlaneseq
        %v804 = vshrl.u32 %v803, 7
        %v805 = vsub.s32 %v802, %v804
        %v806 = vrot.slane %v792, %v805
        %v807 = vcombine.low %v399, %v407
        %v808 = vcombine.high %v399, %v407
        %v810 = vunpack.c.l.s4 1983009808
        %v811 = vunpack.c.0.s8 %v810
        %v812 = vlaneseq
        %v813 = vshrl.u32 %v812, 7
        %v814 = vsub.s32 %v811, %v813
        %v815 = vrot.slane %v807, %v814
        %v817 = vunpack.c.l.s4 1983009808
        %v818 = vunpack.c.0.s8 %v817
        %v819 = vlaneseq
        %v820 = vshrl.u32 %v819, 7
        %v821 = vsub.s32 %v818, %v820
        %v822 = vrot.slane %v808, %v821
        %v823 = vcombine.low %v419, %v427
        %v824 = vcombine.high %v419, %v427
        %v826 = vunpack.c.l.s4 1983009808
        %v827 = vunpack.c.0.s8 %v826
        %v828 = vlaneseq
        %v829 = vshrl.u32 %v828, 7
        %v830 = vsub.s32 %v827, %v829
        %v831 = vrot.slane %v823, %v830
        %v833 = vunpack.c.l.s4 1983009808
        %v834 = vunpack.c.0.s8 %v833
        %v835 = vlaneseq
        %v836 = vshrl.u32 %v835, 7
        %v837 = vsub.s32 %v834, %v836
        %v838 = vrot.slane %v824, %v837
        %v839 = vcombine.low %v423, %v431
        %v840 = vcombine.high %v423, %v431
        %v842 = vunpack.c.l.s4 1983009808
        %v843 = vunpack.c.0.s8 %v842
        %v844 = vlaneseq
        %v845 = vshrl.u32 %v844, 7
        %v846 = vsub.s32 %v843, %v845
        %v847 = vrot.slane %v839, %v846
        %v849 = vunpack.c.l.s4 1983009808
        %v850 = vunpack.c.0.s8 %v849
        %v851 = vlaneseq
        %v852 = vshrl.u32 %v851, 7
        %v853 = vsub.s32 %v850, %v852
        %v854 = vrot.slane %v840, %v853
        %v855 = vcombine.low %v799, %v815
        %v856 = vcombine.high %v799, %v815
        %v858 = vunpack.c.l.s4 1934713408
        %v859 = vunpack.c.0.s8 %v858
        %v860 = vlaneseq
        %v861 = vshrl.u32 %v860, 7
        %v862 = vsub.s32 %v859, %v861
        %v863 = vrot.slane %v855, %v862
        %v865 = vunpack.c.l.s4 1934713408
        %v866 = vunpack.c.0.s8 %v865
        %v867 = vlaneseq
        %v868 = vshrl.u32 %v867, 7
        %v869 = vsub.s32 %v866, %v868
        %v870 = vrot.slane %v856, %v869
        %v871 = vcombine.low %v806, %v822
        %v872 = vcombine.high %v806, %v822
        %v874 = vunpack.c.l.s4 1934713408
        %v875 = vunpack.c.0.s8 %v874
        %v876 = vlaneseq
        %v877 = vshrl.u32 %v876, 7
        %v878 = vsub.s32 %v875, %v877
        %v879 = vrot.slane %v871, %v878
        %v881 = vunpack.c.l.s4 1934713408
        %v882 = vunpack.c.0.s8 %v881
        %v883 = vlaneseq
        %v884 = vshrl.u32 %v883, 7
        %v885 = vsub.s32 %v882, %v884
        %v886 = vrot.slane %v872, %v885
        %v887 = vcombine.low %v831, %v847
        %v888 = vcombine.high %v831, %v847
        %v890 = vunpack.c.l.s4 1934713408
        %v891 = vunpack.c.0.s8 %v890
        %v892 = vlaneseq
        %v893 = vshrl.u32 %v892, 7
        %v894 = vsub.s32 %v891, %v893
        %v895 = vrot.slane %v887, %v894
        %v897 = vunpack.c.l.s4 1934713408
        %v898 = vunpack.c.0.s8 %v897
        %v899 = vlaneseq
        %v900 = vshrl.u32 %v899, 7
        %v901 = vsub.s32 %v898, %v900
        %v902 = vrot.slane %v888, %v901
        %v903 = vcombine.low %v838, %v854
        %v904 = vcombine.high %v838, %v854
        %v906 = vunpack.c.l.s4 1934713408
        %v907 = vunpack.c.0.s8 %v906
        %v908 = vlaneseq
        %v909 = vshrl.u32 %v908, 7
        %v910 = vsub.s32 %v907, %v909
        %v911 = vrot.slane %v903, %v910
        %v913 = vunpack.c.l.s4 1934713408
        %v914 = vunpack.c.0.s8 %v913
        %v915 = vlaneseq
        %v916 = vshrl.u32 %v915, 7
        %v917 = vsub.s32 %v914, %v916
        %v918 = vrot.slane %v904, %v917
        %v919 = vcombine.low %v863, %v895
        %v920 = vcombine.high %v863, %v895
        %v921 = vcombine.low %v870, %v902
        %v922 = vcombine.high %v870, %v902
        %v923 = vcombine.low %v879, %v911
        %v924 = vcombine.high %v879, %v911
        %v925 = vcombine.low %v886, %v918
        %v926 = vcombine.high %v886, %v918
        %v927 = vcombine.low %v445, %v455
        %v928 = vcombine.high %v445, %v455
        %v930 = vunpack.c.l.s4 1983009808
        %v931 = vunpack.c.0.s8 %v930
        %v932 = vlaneseq
        %v933 = vshrl.u32 %v932, 7
        %v934 = vsub.s32 %v931, %v933
        %v935 = vrot.slane %v927, %v934
        %v937 = vunpack.c.l.s4 1983009808
        %v938 = vunpack.c.0.s8 %v937
        %v939 = vlaneseq
        %v940 = vshrl.u32 %v939, 7
        %v941 = vsub.s32 %v938, %v940
        %v942 = vrot.slane %v928, %v941
        %v943 = vcombine.low %v450, %v460
        %v944 = vcombine.high %v450, %v460
        %v946 = vunpack.c.l.s4 1983009808
        %v947 = vunpack.c.0.s8 %v946
        %v948 = vlaneseq
        %v949 = vshrl.u32 %v948, 7
        %v950 = vsub.s32 %v947, %v949
        %v951 = vrot.slane %v943, %v950
        %v953 = vunpack.c.l.s4 1983009808
        %v954 = vunpack.c.0.s8 %v953
        %v955 = vlaneseq
        %v956 = vshrl.u32 %v955, 7
        %v957 = vsub.s32 %v954, %v956
        %v958 = vrot.slane %v944, %v957
        %v959 = vcombine.low %v472, %v480
        %v960 = vcombine.high %v472, %v480
        %v962 = vunpack.c.l.s4 1983009808
        %v963 = vunpack.c.0.s8 %v962
        %v964 = vlaneseq
        %v965 = vshrl.u32 %v964, 7
        %v966 = vsub.s32 %v963, %v965
        %v967 = vrot.slane %v959, %v966
        %v969 = vunpack.c.l.s4 1983009808
        %v970 = vunpack.c.0.s8 %v969
        %v971 = vlaneseq
        %v972 = vshrl.u32 %v971, 7
        %v973 = vsub.s32 %v970, %v972
        %v974 = vrot.slane %v960, %v973
        %v975 = vcombine.low %v476, %v484
        %v976 = vcombine.high %v476, %v484
        %v978 = vunpack.c.l.s4 1983009808
        %v979 = vunpack.c.0.s8 %v978
        %v980 = vlaneseq
        %v981 = vshrl.u32 %v980, 7
        %v982 = vsub.s32 %v979, %v981
        %v983 = vrot.slane %v975, %v982
        %v985 = vunpack.c.l.s4 1983009808
        %v986 = vunpack.c.0.s8 %v985
        %v987 = vlaneseq
        %v988 = vshrl.u32 %v987, 7
        %v989 = vsub.s32 %v986, %v988
        %v990 = vrot.slane %v976, %v989
        %v991 = vcombine.low %v935, %v951
        %v992 = vcombine.high %v935, %v951
        %v994 = vunpack.c.l.s4 1934713408
        %v995 = vunpack.c.0.s8 %v994
        %v996 = vlaneseq
        %v997 = vshrl.u32 %v996, 7
        %v998 = vsub.s32 %v995, %v997
        %v999 = vrot.slane %v991, %v998
        %v1001 = vunpack.c.l.s4 1934713408
        %v1002 = vunpack.c.0.s8 %v1001
        %v1003 = vlaneseq
        %v1004 = vshrl.u32 %v1003, 7
        %v1005 = vsub.s32 %v1002, %v1004
        %v1006 = vrot.slane %v992, %v1005
        %v1007 = vcombine.low %v942, %v958
        %v1008 = vcombine.high %v942, %v958
        %v1010 = vunpack.c.l.s4 1934713408
        %v1011 = vunpack.c.0.s8 %v1010
        %v1012 = vlaneseq
        %v1013 = vshrl.u32 %v1012, 7
        %v1014 = vsub.s32 %v1011, %v1013
        %v1015 = vrot.slane %v1007, %v1014
        %v1017 = vunpack.c.l.s4 1934713408
        %v1018 = vunpack.c.0.s8 %v1017
        %v1019 = vlaneseq
        %v1020 = vshrl.u32 %v1019, 7
        %v1021 = vsub.s32 %v1018, %v1020
        %v1022 = vrot.slane %v1008, %v1021
        %v1023 = vcombine.low %v967, %v983
        %v1024 = vcombine.high %v967, %v983
        %v1026 = vunpack.c.l.s4 1934713408
        %v1027 = vunpack.c.0.s8 %v1026
        %v1028 = vlaneseq
        %v1029 = vshrl.u32 %v1028, 7
        %v1030 = vsub.s32 %v1027, %v1029
        %v1031 = vrot.slane %v1023, %v1030
        %v1033 = vunpack.c.l.s4 1934713408
        %v1034 = vunpack.c.0.s8 %v1033
        %v1035 = vlaneseq
        %v1036 = vshrl.u32 %v1035, 7
        %v1037 = vsub.s32 %v1034, %v1036
        %v1038 = vrot.slane %v1024, %v1037
        %v1039 = vcombine.low %v974, %v990
        %v1040 = vcombine.high %v974, %v990
        %v1042 = vunpack.c.l.s4 1934713408
        %v1043 = vunpack.c.0.s8 %v1042
        %v1044 = vlaneseq
        %v1045 = vshrl.u32 %v1044, 7
        %v1046 = vsub.s32 %v1043, %v1045
        %v1047 = vrot.slane %v1039, %v1046
        %v1049 = vunpack.c.l.s4 1934713408
        %v1050 = vunpack.c.0.s8 %v1049
        %v1051 = vlaneseq
        %v1052 = vshrl.u32 %v1051, 7
        %v1053 = vsub.s32 %v1050, %v1052
        %v1054 = vrot.slane %v1040, %v1053
        %v1055 = vcombine.low %v999, %v1031
        %v1056 = vcombine.high %v999, %v1031
        %v1057 = vcombine.low %v1006, %v1038
        %v1058 = vcombine.high %v1006, %v1038
        %v1059 = vcombine.low %v1015, %v1047
        %v1060 = vcombine.high %v1015, %v1047
        %v1061 = vcombine.low %v1022, %v1054
        %v1062 = vcombine.high %v1022, %v1054
        %v1063 = vcombine.low %v496, %v504
        %v1064 = vcombine.high %v496, %v504
        %v1066 = vunpack.c.l.s4 1983009808
        %v1067 = vunpack.c.0.s8 %v1066
        %v1068 = vlaneseq
        %v1069 = vshrl.u32 %v1068, 7
        %v1070 = vsub.s32 %v1067, %v1069
        %v1071 = vrot.slane %v1063, %v1070
        %v1073 = vunpack.c.l.s4 1983009808
        %v1074 = vunpack.c.0.s8 %v1073
        %v1075 = vlaneseq
        %v1076 = vshrl.u32 %v1075, 7
        %v1077 = vsub.s32 %v1074, %v1076
        %v1078 = vrot.slane %v1064, %v1077
        %v1079 = vcombine.low %v500, %v508
        %v1080 = vcombine.high %v500, %v508
        %v1082 = vunpack.c.l.s4 1983009808
        %v1083 = vunpack.c.0.s8 %v1082
        %v1084 = vlaneseq
        %v1085 = vshrl.u32 %v1084, 7
        %v1086 = vsub.s32 %v1083, %v1085
        %v1087 = vrot.slane %v1079, %v1086
        %v1089 = vunpack.c.l.s4 1983009808
        %v1090 = vunpack.c.0.s8 %v1089
        %v1091 = vlaneseq
        %v1092 = vshrl.u32 %v1091, 7
        %v1093 = vsub.s32 %v1090, %v1092
        %v1094 = vrot.slane %v1080, %v1093
        %v1095 = vcombine.low %v1071, %v1087
        %v1096 = vcombine.high %v1071, %v1087
        %v1098 = vunpack.c.l.s4 1934713408
        %v1099 = vunpack.c.0.s8 %v1098
        %v1100 = vlaneseq
        %v1101 = vshrl.u32 %v1100, 7
        %v1102 = vsub.s32 %v1099, %v1101
        %v1103 = vrot.slane %v1095, %v1102
        %v1105 = vunpack.c.l.s4 1934713408
        %v1106 = vunpack.c.0.s8 %v1105
        %v1107 = vlaneseq
        %v1108 = vshrl.u32 %v1107, 7
        %v1109 = vsub.s32 %v1106, %v1108
        %v1110 = vrot.slane %v1096, %v1109
        %v1111 = vcombine.low %v1078, %v1094
        %v1112 = vcombine.high %v1078, %v1094
        %v1114 = vunpack.c.l.s4 1934713408
        %v1115 = vunpack.c.0.s8 %v1114
        %v1116 = vlaneseq
        %v1117 = vshrl.u32 %v1116, 7
        %v1118 = vsub.s32 %v1115, %v1117
        %v1119 = vrot.slane %v1111, %v1118
        %v1121 = vunpack.c.l.s4 1934713408
        %v1122 = vunpack.c.0.s8 %v1121
        %v1123 = vlaneseq
        %v1124 = vshrl.u32 %v1123, 7
        %v1125 = vsub.s32 %v1122, %v1124
        %v1126 = vrot.slane %v1112, %v1125
        %v1127 = vcombine.high %v1103, 0.0
        %v1128 = vcombine.high %v1110, 0.0
        %v1129 = vcombine.high %v1119, 0.0
        %v1130 = vcombine.high %v1126, 0.0
        %v1131 = vcombine.low %v294, %v300
        %v1132 = vcombine.high %v294, %v300
        %v1134 = vunpack.c.l.s4 1983009808
        %v1135 = vunpack.c.0.s8 %v1134
        %v1136 = vlaneseq
        %v1137 = vshrl.u32 %v1136, 7
        %v1138 = vsub.s32 %v1135, %v1137
        %v1139 = vrot.slane %v1131, %v1138
        %v1141 = vunpack.c.l.s4 1983009808
        %v1142 = vunpack.c.0.s8 %v1141
        %v1143 = vlaneseq
        %v1144 = vshrl.u32 %v1143, 7
        %v1145 = vsub.s32 %v1142, %v1144
        %v1146 = vrot.slane %v1132, %v1145
        %v1147 = vcombine.low %v297, %v303
        %v1148 = vcombine.high %v297, %v303
        %v1150 = vunpack.c.l.s4 1983009808
        %v1151 = vunpack.c.0.s8 %v1150
        %v1152 = vlaneseq
        %v1153 = vshrl.u32 %v1152, 7
        %v1154 = vsub.s32 %v1151, %v1153
        %v1155 = vrot.slane %v1147, %v1154
        %v1157 = vunpack.c.l.s4 1983009808
        %v1158 = vunpack.c.0.s8 %v1157
        %v1159 = vlaneseq
        %v1160 = vshrl.u32 %v1159, 7
        %v1161 = vsub.s32 %v1158, %v1160
        %v1162 = vrot.slane %v1148, %v1161
        %v1163 = vcombine.low %v316, %v324
        %v1164 = vcombine.high %v316, %v324
        %v1166 = vunpack.c.l.s4 1983009808
        %v1167 = vunpack.c.0.s8 %v1166
        %v1168 = vlaneseq
        %v1169 = vshrl.u32 %v1168, 7
        %v1170 = vsub.s32 %v1167, %v1169
        %v1171 = vrot.slane %v1163, %v1170
        %v1173 = vunpack.c.l.s4 1983009808
        %v1174 = vunpack.c.0.s8 %v1173
        %v1175 = vlaneseq
        %v1176 = vshrl.u32 %v1175, 7
        %v1177 = vsub.s32 %v1174, %v1176
        %v1178 = vrot.slane %v1164, %v1177
        %v1179 = vcombine.low %v320, %v328
        %v1180 = vcombine.high %v320, %v328
        %v1182 = vunpack.c.l.s4 1983009808
        %v1183 = vunpack.c.0.s8 %v1182
        %v1184 = vlaneseq
        %v1185 = vshrl.u32 %v1184, 7
        %v1186 = vsub.s32 %v1183, %v1185
        %v1187 = vrot.slane %v1179, %v1186
        %v1189 = vunpack.c.l.s4 1983009808
        %v1190 = vunpack.c.0.s8 %v1189
        %v1191 = vlaneseq
        %v1192 = vshrl.u32 %v1191, 7
        %v1193 = vsub.s32 %v1190, %v1192
        %v1194 = vrot.slane %v1180, %v1193
        %v1195 = vcombine.low %v1139, %v1155
        %v1196 = vcombine.high %v1139, %v1155
        %v1198 = vunpack.c.l.s4 1934713408
        %v1199 = vunpack.c.0.s8 %v1198
        %v1200 = vlaneseq
        %v1201 = vshrl.u32 %v1200, 7
        %v1202 = vsub.s32 %v1199, %v1201
        %v1203 = vrot.slane %v1195, %v1202
        %v1205 = vunpack.c.l.s4 1934713408
        %v1206 = vunpack.c.0.s8 %v1205
        %v1207 = vlaneseq
        %v1208 = vshrl.u32 %v1207, 7
        %v1209 = vsub.s32 %v1206, %v1208
        %v1210 = vrot.slane %v1196, %v1209
        %v1211 = vcombine.low %v1146, %v1162
        %v1212 = vcombine.high %v1146, %v1162
        %v1214 = vunpack.c.l.s4 1934713408
        %v1215 = vunpack.c.0.s8 %v1214
        %v1216 = vlaneseq
        %v1217 = vshrl.u32 %v1216, 7
        %v1218 = vsub.s32 %v1215, %v1217
        %v1219 = vrot.slane %v1211, %v1218
        %v1221 = vunpack.c.l.s4 1934713408
        %v1222 = vunpack.c.0.s8 %v1221
        %v1223 = vlaneseq
        %v1224 = vshrl.u32 %v1223, 7
        %v1225 = vsub.s32 %v1222, %v1224
        %v1226 = vrot.slane %v1212, %v1225
        %v1227 = vcombine.low %v1171, %v1187
        %v1228 = vcombine.high %v1171, %v1187
        %v1230 = vunpack.c.l.s4 1934713408
        %v1231 = vunpack.c.0.s8 %v1230
        %v1232 = vlaneseq
        %v1233 = vshrl.u32 %v1232, 7
        %v1234 = vsub.s32 %v1231, %v1233
        %v1235 = vrot.slane %v1227, %v1234
        %v1237 = vunpack.c.l.s4 1934713408
        %v1238 = vunpack.c.0.s8 %v1237
        %v1239 = vlaneseq
        %v1240 = vshrl.u32 %v1239, 7
        %v1241 = vsub.s32 %v1238, %v1240
        %v1242 = vrot.slane %v1228, %v1241
        %v1243 = vcombine.low %v1178, %v1194
        %v1244 = vcombine.high %v1178, %v1194
        %v1246 = vunpack.c.l.s4 1934713408
        %v1247 = vunpack.c.0.s8 %v1246
        %v1248 = vlaneseq
        %v1249 = vshrl.u32 %v1248, 7
        %v1250 = vsub.s32 %v1247, %v1249
        %v1251 = vrot.slane %v1243, %v1250
        %v1253 = vunpack.c.l.s4 1934713408
        %v1254 = vunpack.c.0.s8 %v1253
        %v1255 = vlaneseq
        %v1256 = vshrl.u32 %v1255, 7
        %v1257 = vsub.s32 %v1254, %v1256
        %v1258 = vrot.slane %v1244, %v1257
        %v1259 = vcombine.low %v1203, %v1235
        %v1260 = vcombine.high %v1203, %v1235
        %v1261 = vcombine.low %v1210, %v1242
        %v1262 = vcombine.high %v1210, %v1242
        %v1263 = vcombine.low %v1219, %v1251
        %v1264 = vcombine.high %v1219, %v1251
        %v1265 = vcombine.low %v1226, %v1258
        %v1266 = vcombine.high %v1226, %v1258
        %v1267 = vcombine.low %v340, %v348
        %v1268 = vcombine.high %v340, %v348
        %v1270 = vunpack.c.l.s4 1983009808
        %v1271 = vunpack.c.0.s8 %v1270
        %v1272 = vlaneseq
        %v1273 = vshrl.u32 %v1272, 7
        %v1274 = vsub.s32 %v1271, %v1273
        %v1275 = vrot.slane %v1267, %v1274
        %v1277 = vunpack.c.l.s4 1983009808
        %v1278 = vunpack.c.0.s8 %v1277
        %v1279 = vlaneseq
        %v1280 = vshrl.u32 %v1279, 7
        %v1281 = vsub.s32 %v1278, %v1280
        %v1282 = vrot.slane %v1268, %v1281
        %v1283 = vcombine.low %v344, %v352
        %v1284 = vcombine.high %v344, %v352
        %v1286 = vunpack.c.l.s4 1983009808
        %v1287 = vunpack.c.0.s8 %v1286
        %v1288 = vlaneseq
        %v1289 = vshrl.u32 %v1288, 7
        %v1290 = vsub.s32 %v1287, %v1289
        %v1291 = vrot.slane %v1283, %v1290
        %v1293 = vunpack.c.l.s4 1983009808
        %v1294 = vunpack.c.0.s8 %v1293
        %v1295 = vlaneseq
        %v1296 = vshrl.u32 %v1295, 7
        %v1297 = vsub.s32 %v1294, %v1296
        %v1298 = vrot.slane %v1284, %v1297
        %v1299 = vcombine.low %v370, %v380
        %v1300 = vcombine.high %v370, %v380
        %v1302 = vunpack.c.l.s4 1983009808
        %v1303 = vunpack.c.0.s8 %v1302
        %v1304 = vlaneseq
        %v1305 = vshrl.u32 %v1304, 7
        %v1306 = vsub.s32 %v1303, %v1305
        %v1307 = vrot.slane %v1299, %v1306
        %v1309 = vunpack.c.l.s4 1983009808
        %v1310 = vunpack.c.0.s8 %v1309
        %v1311 = vlaneseq
        %v1312 = vshrl.u32 %v1311, 7
        %v1313 = vsub.s32 %v1310, %v1312
        %v1314 = vrot.slane %v1300, %v1313
        %v1315 = vcombine.low %v375, %v385
        %v1316 = vcombine.high %v375, %v385
        %v1318 = vunpack.c.l.s4 1983009808
        %v1319 = vunpack.c.0.s8 %v1318
        %v1320 = vlaneseq
        %v1321 = vshrl.u32 %v1320, 7
        %v1322 = vsub.s32 %v1319, %v1321
        %v1323 = vrot.slane %v1315, %v1322
        %v1325 = vunpack.c.l.s4 1983009808
        %v1326 = vunpack.c.0.s8 %v1325
        %v1327 = vlaneseq
        %v1328 = vshrl.u32 %v1327, 7
        %v1329 = vsub.s32 %v1326, %v1328
        %v1330 = vrot.slane %v1316, %v1329
        %v1331 = vcombine.low %v1275, %v1291
        %v1332 = vcombine.high %v1275, %v1291
        %v1334 = vunpack.c.l.s4 1934713408
        %v1335 = vunpack.c.0.s8 %v1334
        %v1336 = vlaneseq
        %v1337 = vshrl.u32 %v1336, 7
        %v1338 = vsub.s32 %v1335, %v1337
        %v1339 = vrot.slane %v1331, %v1338
        %v1341 = vunpack.c.l.s4 1934713408
        %v1342 = vunpack.c.0.s8 %v1341
        %v1343 = vlaneseq
        %v1344 = vshrl.u32 %v1343, 7
        %v1345 = vsub.s32 %v1342, %v1344
        %v1346 = vrot.slane %v1332, %v1345
        %v1347 = vcombine.low %v1282, %v1298
        %v1348 = vcombine.high %v1282, %v1298
        %v1350 = vunpack.c.l.s4 1934713408
        %v1351 = vunpack.c.0.s8 %v1350
        %v1352 = vlaneseq
        %v1353 = vshrl.u32 %v1352, 7
        %v1354 = vsub.s32 %v1351, %v1353
        %v1355 = vrot.slane %v1347, %v1354
        %v1357 = vunpack.c.l.s4 1934713408
        %v1358 = vunpack.c.0.s8 %v1357
        %v1359 = vlaneseq
        %v1360 = vshrl.u32 %v1359, 7
        %v1361 = vsub.s32 %v1358, %v1360
        %v1362 = vrot.slane %v1348, %v1361
        %v1363 = vcombine.low %v1307, %v1323
        %v1364 = vcombine.high %v1307, %v1323
        %v1366 = vunpack.c.l.s4 1934713408
        %v1367 = vunpack.c.0.s8 %v1366
        %v1368 = vlaneseq
        %v1369 = vshrl.u32 %v1368, 7
        %v1370 = vsub.s32 %v1367, %v1369
        %v1371 = vrot.slane %v1363, %v1370
        %v1373 = vunpack.c.l.s4 1934713408
        %v1374 = vunpack.c.0.s8 %v1373
        %v1375 = vlaneseq
        %v1376 = vshrl.u32 %v1375, 7
        %v1377 = vsub.s32 %v1374, %v1376
        %v1378 = vrot.slane %v1364, %v1377
        %v1379 = vcombine.low %v1314, %v1330
        %v1380 = vcombine.high %v1314, %v1330
        %v1382 = vunpack.c.l.s4 1934713408
        %v1383 = vunpack.c.0.s8 %v1382
        %v1384 = vlaneseq
        %v1385 = vshrl.u32 %v1384, 7
        %v1386 = vsub.s32 %v1383, %v1385
        %v1387 = vrot.slane %v1379, %v1386
        %v1389 = vunpack.c.l.s4 1934713408
        %v1390 = vunpack.c.0.s8 %v1389
        %v1391 = vlaneseq
        %v1392 = vshrl.u32 %v1391, 7
        %v1393 = vsub.s32 %v1390, %v1392
        %v1394 = vrot.slane %v1380, %v1393
        %v1395 = vcombine.low %v1339, %v1371
        %v1396 = vcombine.high %v1339, %v1371
        %v1397 = vcombine.low %v1346, %v1378
        %v1398 = vcombine.high %v1346, %v1378
        %v1399 = vcombine.low %v1355, %v1387
        %v1400 = vcombine.high %v1355, %v1387
        %v1401 = vcombine.low %v1362, %v1394
        %v1402 = vcombine.high %v1362, %v1394
        %v1403 = vcombine.low %v397, %v405
        %v1404 = vcombine.high %v397, %v405
        %v1406 = vunpack.c.l.s4 1983009808
        %v1407 = vunpack.c.0.s8 %v1406
        %v1408 = vlaneseq
        %v1409 = vshrl.u32 %v1408, 7
        %v1410 = vsub.s32 %v1407, %v1409
        %v1411 = vrot.slane %v1403, %v1410
        %v1413 = vunpack.c.l.s4 1983009808
        %v1414 = vunpack.c.0.s8 %v1413
        %v1415 = vlaneseq
        %v1416 = vshrl.u32 %v1415, 7
        %v1417 = vsub.s32 %v1414, %v1416
        %v1418 = vrot.slane %v1404, %v1417
        %v1419 = vcombine.low %v401, %v409
        %v1420 = vcombine.high %v401, %v409
        %v1422 = vunpack.c.l.s4 1983009808
        %v1423 = vunpack.c.0.s8 %v1422
        %v1424 = vlaneseq
        %v1425 = vshrl.u32 %v1424, 7
        %v1426 = vsub.s32 %v1423, %v1425
        %v1427 = vrot.slane %v1419, %v1426
        %v1429 = vunpack.c.l.s4 1983009808
        %v1430 = vunpack.c.0.s8 %v1429
        %v1431 = vlaneseq
        %v1432 = vshrl.u32 %v1431, 7
        %v1433 = vsub.s32 %v1430, %v1432
        %v1434 = vrot.slane %v1420, %v1433
        %v1435 = vcombine.low %v421, %v429
        %v1436 = vcombine.high %v421, %v429
        %v1438 = vunpack.c.l.s4 1983009808
        %v1439 = vunpack.c.0.s8 %v1438
        %v1440 = vlaneseq
        %v1441 = vshrl.u32 %v1440, 7
        %v1442 = vsub.s32 %v1439, %v1441
        %v1443 = vrot.slane %v1435, %v1442
        %v1445 = vunpack.c.l.s4 1983009808
        %v1446 = vunpack.c.0.s8 %v1445
        %v1447 = vlaneseq
        %v1448 = vshrl.u32 %v1447, 7
        %v1449 = vsub.s32 %v1446, %v1448
        %v1450 = vrot.slane %v1436, %v1449
        %v1451 = vcombine.low %v425, %v433
        %v1452 = vcombine.high %v425, %v433
        %v1454 = vunpack.c.l.s4 1983009808
        %v1455 = vunpack.c.0.s8 %v1454
        %v1456 = vlaneseq
        %v1457 = vshrl.u32 %v1456, 7
        %v1458 = vsub.s32 %v1455, %v1457
        %v1459 = vrot.slane %v1451, %v1458
        %v1461 = vunpack.c.l.s4 1983009808
        %v1462 = vunpack.c.0.s8 %v1461
        %v1463 = vlaneseq
        %v1464 = vshrl.u32 %v1463, 7
        %v1465 = vsub.s32 %v1462, %v1464
        %v1466 = vrot.slane %v1452, %v1465
        %v1467 = vcombine.low %v1411, %v1427
        %v1468 = vcombine.high %v1411, %v1427
        %v1470 = vunpack.c.l.s4 1934713408
        %v1471 = vunpack.c.0.s8 %v1470
        %v1472 = vlaneseq
        %v1473 = vshrl.u32 %v1472, 7
        %v1474 = vsub.s32 %v1471, %v1473
        %v1475 = vrot.slane %v1467, %v1474
        %v1477 = vunpack.c.l.s4 1934713408
        %v1478 = vunpack.c.0.s8 %v1477
        %v1479 = vlaneseq
        %v1480 = vshrl.u32 %v1479, 7
        %v1481 = vsub.s32 %v1478, %v1480
        %v1482 = vrot.slane %v1468, %v1481
        %v1483 = vcombine.low %v1418, %v1434
        %v1484 = vcombine.high %v1418, %v1434
        %v1486 = vunpack.c.l.s4 1934713408
        %v1487 = vunpack.c.0.s8 %v1486
        %v1488 = vlaneseq
        %v1489 = vshrl.u32 %v1488, 7
        %v1490 = vsub.s32 %v1487, %v1489
        %v1491 = vrot.slane %v1483, %v1490
        %v1493 = vunpack.c.l.s4 1934713408
        %v1494 = vunpack.c.0.s8 %v1493
        %v1495 = vlaneseq
        %v1496 = vshrl.u32 %v1495, 7
        %v1497 = vsub.s32 %v1494, %v1496
        %v1498 = vrot.slane %v1484, %v1497
        %v1499 = vcombine.low %v1443, %v1459
        %v1500 = vcombine.high %v1443, %v1459
        %v1502 = vunpack.c.l.s4 1934713408
        %v1503 = vunpack.c.0.s8 %v1502
        %v1504 = vlaneseq
        %v1505 = vshrl.u32 %v1504, 7
        %v1506 = vsub.s32 %v1503, %v1505
        %v1507 = vrot.slane %v1499, %v1506
        %v1509 = vunpack.c.l.s4 1934713408
        %v1510 = vunpack.c.0.s8 %v1509
        %v1511 = vlaneseq
        %v1512 = vshrl.u32 %v1511, 7
        %v1513 = vsub.s32 %v1510, %v1512
        %v1514 = vrot.slane %v1500, %v1513
        %v1515 = vcombine.low %v1450, %v1466
        %v1516 = vcombine.high %v1450, %v1466
        %v1518 = vunpack.c.l.s4 1934713408
        %v1519 = vunpack.c.0.s8 %v1518
        %v1520 = vlaneseq
        %v1521 = vshrl.u32 %v1520, 7
        %v1522 = vsub.s32 %v1519, %v1521
        %v1523 = vrot.slane %v1515, %v1522
        %v1525 = vunpack.c.l.s4 1934713408
        %v1526 = vunpack.c.0.s8 %v1525
        %v1527 = vlaneseq
        %v1528 = vshrl.u32 %v1527, 7
        %v1529 = vsub.s32 %v1526, %v1528
        %v1530 = vrot.slane %v1516, %v1529
        %v1531 = vcombine.low %v1475, %v1507
        %v1532 = vcombine.high %v1475, %v1507
        %v1533 = vcombine.low %v1482, %v1514
        %v1534 = vcombine.high %v1482, %v1514
        %v1535 = vcombine.low %v1491, %v1523
        %v1536 = vcombine.high %v1491, %v1523
        %v1537 = vcombine.low %v1498, %v1530
        %v1538 = vcombine.high %v1498, %v1530
        %v1539 = vcombine.low %v447, %v457
        %v1540 = vcombine.high %v447, %v457
        %v1542 = vunpack.c.l.s4 1983009808
        %v1543 = vunpack.c.0.s8 %v1542
        %v1544 = vlaneseq
        %v1545 = vshrl.u32 %v1544, 7
        %v1546 = vsub.s32 %v1543, %v1545
        %v1547 = vrot.slane %v1539, %v1546
        %v1549 = vunpack.c.l.s4 1983009808
        %v1550 = vunpack.c.0.s8 %v1549
        %v1551 = vlaneseq
        %v1552 = vshrl.u32 %v1551, 7
        %v1553 = vsub.s32 %v1550, %v1552
        %v1554 = vrot.slane %v1540, %v1553
        %v1555 = vcombine.low %v452, %v462
        %v1556 = vcombine.high %v452, %v462
        %v1558 = vunpack.c.l.s4 1983009808
        %v1559 = vunpack.c.0.s8 %v1558
        %v1560 = vlaneseq
        %v1561 = vshrl.u32 %v1560, 7
        %v1562 = vsub.s32 %v1559, %v1561
        %v1563 = vrot.slane %v1555, %v1562
        %v1565 = vunpack.c.l.s4 1983009808
        %v1566 = vunpack.c.0.s8 %v1565
        %v1567 = vlaneseq
        %v1568 = vshrl.u32 %v1567, 7
        %v1569 = vsub.s32 %v1566, %v1568
        %v1570 = vrot.slane %v1556, %v1569
        %v1571 = vcombine.low %v474, %v482
        %v1572 = vcombine.high %v474, %v482
        %v1574 = vunpack.c.l.s4 1983009808
        %v1575 = vunpack.c.0.s8 %v1574
        %v1576 = vlaneseq
        %v1577 = vshrl.u32 %v1576, 7
        %v1578 = vsub.s32 %v1575, %v1577
        %v1579 = vrot.slane %v1571, %v1578
        %v1581 = vunpack.c.l.s4 1983009808
        %v1582 = vunpack.c.0.s8 %v1581
        %v1583 = vlaneseq
        %v1584 = vshrl.u32 %v1583, 7
        %v1585 = vsub.s32 %v1582, %v1584
        %v1586 = vrot.slane %v1572, %v1585
        %v1587 = vcombine.low %v478, %v486
        %v1588 = vcombine.high %v478, %v486
        %v1590 = vunpack.c.l.s4 1983009808
        %v1591 = vunpack.c.0.s8 %v1590
        %v1592 = vlaneseq
        %v1593 = vshrl.u32 %v1592, 7
        %v1594 = vsub.s32 %v1591, %v1593
        %v1595 = vrot.slane %v1587, %v1594
        %v1597 = vunpack.c.l.s4 1983009808
        %v1598 = vunpack.c.0.s8 %v1597
        %v1599 = vlaneseq
        %v1600 = vshrl.u32 %v1599, 7
        %v1601 = vsub.s32 %v1598, %v1600
        %v1602 = vrot.slane %v1588, %v1601
        %v1603 = vcombine.low %v1547, %v1563
        %v1604 = vcombine.high %v1547, %v1563
        %v1606 = vunpack.c.l.s4 1934713408
        %v1607 = vunpack.c.0.s8 %v1606
        %v1608 = vlaneseq
        %v1609 = vshrl.u32 %v1608, 7
        %v1610 = vsub.s32 %v1607, %v1609
        %v1611 = vrot.slane %v1603, %v1610
        %v1613 = vunpack.c.l.s4 1934713408
        %v1614 = vunpack.c.0.s8 %v1613
        %v1615 = vlaneseq
        %v1616 = vshrl.u32 %v1615, 7
        %v1617 = vsub.s32 %v1614, %v1616
        %v1618 = vrot.slane %v1604, %v1617
        %v1619 = vcombine.low %v1554, %v1570
        %v1620 = vcombine.high %v1554, %v1570
        %v1622 = vunpack.c.l.s4 1934713408
        %v1623 = vunpack.c.0.s8 %v1622
        %v1624 = vlaneseq
        %v1625 = vshrl.u32 %v1624, 7
        %v1626 = vsub.s32 %v1623, %v1625
        %v1627 = vrot.slane %v1619, %v1626
        %v1629 = vunpack.c.l.s4 1934713408
        %v1630 = vunpack.c.0.s8 %v1629
        %v1631 = vlaneseq
        %v1632 = vshrl.u32 %v1631, 7
        %v1633 = vsub.s32 %v1630, %v1632
        %v1634 = vrot.slane %v1620, %v1633
        %v1635 = vcombine.low %v1579, %v1595
        %v1636 = vcombine.high %v1579, %v1595
        %v1638 = vunpack.c.l.s4 1934713408
        %v1639 = vunpack.c.0.s8 %v1638
        %v1640 = vlaneseq
        %v1641 = vshrl.u32 %v1640, 7
        %v1642 = vsub.s32 %v1639, %v1641
        %v1643 = vrot.slane %v1635, %v1642
        %v1645 = vunpack.c.l.s4 1934713408
        %v1646 = vunpack.c.0.s8 %v1645
        %v1647 = vlaneseq
        %v1648 = vshrl.u32 %v1647, 7
        %v1649 = vsub.s32 %v1646, %v1648
        %v1650 = vrot.slane %v1636, %v1649
        %v1651 = vcombine.low %v1586, %v1602
        %v1652 = vcombine.high %v1586, %v1602
        %v1654 = vunpack.c.l.s4 1934713408
        %v1655 = vunpack.c.0.s8 %v1654
        %v1656 = vlaneseq
        %v1657 = vshrl.u32 %v1656, 7
        %v1658 = vsub.s32 %v1655, %v1657
        %v1659 = vrot.slane %v1651, %v1658
        %v1661 = vunpack.c.l.s4 1934713408
        %v1662 = vunpack.c.0.s8 %v1661
        %v1663 = vlaneseq
        %v1664 = vshrl.u32 %v1663, 7
        %v1665 = vsub.s32 %v1662, %v1664
        %v1666 = vrot.slane %v1652, %v1665
        %v1667 = vcombine.low %v1611, %v1643
        %v1668 = vcombine.high %v1611, %v1643
        %v1669 = vcombine.low %v1618, %v1650
        %v1670 = vcombine.high %v1618, %v1650
        %v1671 = vcombine.low %v1627, %v1659
        %v1672 = vcombine.high %v1627, %v1659
        %v1673 = vcombine.low %v1634, %v1666
        %v1674 = vcombine.high %v1634, %v1666
        %v1675 = vcombine.low %v498, %v506
        %v1676 = vcombine.high %v498, %v506
        %v1678 = vunpack.c.l.s4 1983009808
        %v1679 = vunpack.c.0.s8 %v1678
        %v1680 = vlaneseq
        %v1681 = vshrl.u32 %v1680, 7
        %v1682 = vsub.s32 %v1679, %v1681
        %v1683 = vrot.slane %v1675, %v1682
        %v1685 = vunpack.c.l.s4 1983009808
        %v1686 = vunpack.c.0.s8 %v1685
        %v1687 = vlaneseq
        %v1688 = vshrl.u32 %v1687, 7
        %v1689 = vsub.s32 %v1686, %v1688
        %v1690 = vrot.slane %v1676, %v1689
        %v1691 = vcombine.low %v502, %v510
        %v1692 = vcombine.high %v502, %v510
        %v1694 = vunpack.c.l.s4 1983009808
        %v1695 = vunpack.c.0.s8 %v1694
        %v1696 = vlaneseq
        %v1697 = vshrl.u32 %v1696, 7
        %v1698 = vsub.s32 %v1695, %v1697
        %v1699 = vrot.slane %v1691, %v1698
        %v1701 = vunpack.c.l.s4 1983009808
        %v1702 = vunpack.c.0.s8 %v1701
        %v1703 = vlaneseq
        %v1704 = vshrl.u32 %v1703, 7
        %v1705 = vsub.s32 %v1702, %v1704
        %v1706 = vrot.slane %v1692, %v1705
        %v1707 = vcombine.low %v1683, %v1699
        %v1708 = vcombine.high %v1683, %v1699
        %v1710 = vunpack.c.l.s4 1934713408
        %v1711 = vunpack.c.0.s8 %v1710
        %v1712 = vlaneseq
        %v1713 = vshrl.u32 %v1712, 7
        %v1714 = vsub.s32 %v1711, %v1713
        %v1715 = vrot.slane %v1707, %v1714
        %v1717 = vunpack.c.l.s4 1934713408
        %v1718 = vunpack.c.0.s8 %v1717
        %v1719 = vlaneseq
        %v1720 = vshrl.u32 %v1719, 7
        %v1721 = vsub.s32 %v1718, %v1720
        %v1722 = vrot.slane %v1708, %v1721
        %v1723 = vcombine.low %v1690, %v1706
        %v1724 = vcombine.high %v1690, %v1706
        %v1726 = vunpack.c.l.s4 1934713408
        %v1727 = vunpack.c.0.s8 %v1726
        %v1728 = vlaneseq
        %v1729 = vshrl.u32 %v1728, 7
        %v1730 = vsub.s32 %v1727, %v1729
        %v1731 = vrot.slane %v1723, %v1730
        %v1733 = vunpack.c.l.s4 1934713408
        %v1734 = vunpack.c.0.s8 %v1733
        %v1735 = vlaneseq
        %v1736 = vshrl.u32 %v1735, 7
        %v1737 = vsub.s32 %v1734, %v1736
        %v1738 = vrot.slane %v1724, %v1737
        %v1739 = vcombine.high %v1715, 0.0
        %v1740 = vcombine.high %v1722, 0.0
        %v1741 = vcombine.high %v1731, 0.0
        %v1742 = vcombine.high %v1738, 0.0
        %1748 = vrot.lane.b32.xlu0 %v648, 16
        %v1749 = vpop.permute.xlu0 %1748
        %1750 = vrot.lane.b32.xlu0 %v784, 16
        %v1751 = vpop.permute.xlu0 %1750
        %1752 = vrot.lane.b32.xlu0 %v920, 16
        %v1753 = vpop.permute.xlu0 %1752
        %1754 = vrot.lane.b32.xlu0 %v1056, 16
        %v1755 = vpop.permute.xlu0 %1754
        %1756 = vrot.lane.b32.xlu0 %v1127, 16
        %v1757 = vpop.permute.xlu0 %1756
        %1768 = vrot.lane.b32.xlu0 %v649, 32
        %v1769 = vpop.permute.xlu0 %1768
        %1770 = vrot.lane.b32.xlu0 %v785, 32
        %v1771 = vpop.permute.xlu0 %1770
        %1772 = vrot.lane.b32.xlu0 %v921, 32
        %v1773 = vpop.permute.xlu0 %1772
        %1774 = vrot.lane.b32.xlu0 %v1057, 32
        %v1775 = vpop.permute.xlu0 %1774
        %1776 = vrot.lane.b32.xlu0 %v1110, 32
        %v1777 = vpop.permute.xlu0 %1776
        %1788 = vrot.lane.b32.xlu0 %v650, 48
        %v1789 = vpop.permute.xlu0 %1788
        %1790 = vrot.lane.b32.xlu0 %v786, 48
        %v1791 = vpop.permute.xlu0 %1790
        %1792 = vrot.lane.b32.xlu0 %v922, 48
        %v1793 = vpop.permute.xlu0 %1792
        %1794 = vrot.lane.b32.xlu0 %v1058, 48
        %v1795 = vpop.permute.xlu0 %1794
        %1796 = vrot.lane.b32.xlu0 %v1128, 48
        %v1797 = vpop.permute.xlu0 %1796
        %1808 = vrot.lane.b32.xlu0 %v651, 64
        %v1809 = vpop.permute.xlu0 %1808
        %1810 = vrot.lane.b32.xlu0 %v787, 64
        %v1811 = vpop.permute.xlu0 %1810
        %1812 = vrot.lane.b32.xlu0 %v923, 64
        %v1813 = vpop.permute.xlu0 %1812
        %1814 = vrot.lane.b32.xlu0 %v1059, 64
        %v1815 = vpop.permute.xlu0 %1814
        %1816 = vrot.lane.b32.xlu0 %v1119, 64
        %v1817 = vpop.permute.xlu0 %1816
        %1828 = vrot.lane.b32.xlu0 %v652, 80
        %v1829 = vpop.permute.xlu0 %1828
        %1830 = vrot.lane.b32.xlu0 %v788, 80
        %v1831 = vpop.permute.xlu0 %1830
        %1832 = vrot.lane.b32.xlu0 %v924, 80
        %v1833 = vpop.permute.xlu0 %1832
        %1834 = vrot.lane.b32.xlu0 %v1060, 80
        %v1835 = vpop.permute.xlu0 %1834
        %1836 = vrot.lane.b32.xlu0 %v1129, 80
        %v1837 = vpop.permute.xlu0 %1836
        %1848 = vrot.lane.b32.xlu0 %v653, 96
        %v1849 = vpop.permute.xlu0 %1848
        %1850 = vrot.lane.b32.xlu0 %v789, 96
        %v1851 = vpop.permute.xlu0 %1850
        %1852 = vrot.lane.b32.xlu0 %v925, 96
        %v1853 = vpop.permute.xlu0 %1852
        %1854 = vrot.lane.b32.xlu0 %v1061, 96
        %v1855 = vpop.permute.xlu0 %1854
        %1856 = vrot.lane.b32.xlu0 %v1126, 96
        %v1857 = vpop.permute.xlu0 %1856
        %1868 = vrot.lane.b32.xlu0 %v654, 112
        %v1869 = vpop.permute.xlu0 %1868
        %1870 = vrot.lane.b32.xlu0 %v790, 112
        %v1871 = vpop.permute.xlu0 %1870
        %1872 = vrot.lane.b32.xlu0 %v926, 112
        %v1873 = vpop.permute.xlu0 %1872
        %1874 = vrot.lane.b32.xlu0 %v1062, 112
        %v1875 = vpop.permute.xlu0 %1874
        %1876 = vrot.lane.b32.xlu0 %v1130, 112
        %v1877 = vpop.permute.xlu0 %1876
        %1888 = vrot.lane.b32.xlu0 %v1260, 16
        %v1889 = vpop.permute.xlu0 %1888
        %1890 = vrot.lane.b32.xlu0 %v1396, 16
        %v1891 = vpop.permute.xlu0 %1890
        %1892 = vrot.lane.b32.xlu0 %v1532, 16
        %v1893 = vpop.permute.xlu0 %1892
        %1894 = vrot.lane.b32.xlu0 %v1668, 16
        %v1895 = vpop.permute.xlu0 %1894
        %1896 = vrot.lane.b32.xlu0 %v1739, 16
        %v1897 = vpop.permute.xlu0 %1896
        %1908 = vrot.lane.b32.xlu0 %v1261, 32
        %v1909 = vpop.permute.xlu0 %1908
        %1910 = vrot.lane.b32.xlu0 %v1397, 32
        %v1911 = vpop.permute.xlu0 %1910
        %1912 = vrot.lane.b32.xlu0 %v1533, 32
        %v1913 = vpop.permute.xlu0 %1912
        %1914 = vrot.lane.b32.xlu0 %v1669, 32
        %v1915 = vpop.permute.xlu0 %1914
        %1916 = vrot.lane.b32.xlu0 %v1722, 32
        %v1917 = vpop.permute.xlu0 %1916
        %1928 = vrot.lane.b32.xlu0 %v1262, 48
        %v1929 = vpop.permute.xlu0 %1928
        %1930 = vrot.lane.b32.xlu0 %v1398, 48
        %v1931 = vpop.permute.xlu0 %1930
        %1932 = vrot.lane.b32.xlu0 %v1534, 48
        %v1933 = vpop.permute.xlu0 %1932
        %1934 = vrot.lane.b32.xlu0 %v1670, 48
        %v1935 = vpop.permute.xlu0 %1934
        %1936 = vrot.lane.b32.xlu0 %v1740, 48
        %v1937 = vpop.permute.xlu0 %1936
        %1948 = vrot.lane.b32.xlu0 %v1263, 64
        %v1949 = vpop.permute.xlu0 %1948
        %1950 = vrot.lane.b32.xlu0 %v1399, 64
        %v1951 = vpop.permute.xlu0 %1950
        %1952 = vrot.lane.b32.xlu0 %v1535, 64
        %v1953 = vpop.permute.xlu0 %1952
        %1954 = vrot.lane.b32.xlu0 %v1671, 64
        %v1955 = vpop.permute.xlu0 %1954
        %1956 = vrot.lane.b32.xlu0 %v1731, 64
        %v1957 = vpop.permute.xlu0 %1956
        %1968 = vrot.lane.b32.xlu0 %v1264, 80
        %v1969 = vpop.permute.xlu0 %1968
        %1970 = vrot.lane.b32.xlu0 %v1400, 80
        %v1971 = vpop.permute.xlu0 %1970
        %1972 = vrot.lane.b32.xlu0 %v1536, 80
        %v1973 = vpop.permute.xlu0 %1972
        %1974 = vrot.lane.b32.xlu0 %v1672, 80
        %v1975 = vpop.permute.xlu0 %1974
        %1976 = vrot.lane.b32.xlu0 %v1741, 80
        %v1977 = vpop.permute.xlu0 %1976
        %1988 = vrot.lane.b32.xlu0 %v1265, 96
        %v1989 = vpop.permute.xlu0 %1988
        %1990 = vrot.lane.b32.xlu0 %v1401, 96
        %v1991 = vpop.permute.xlu0 %1990
        %1992 = vrot.lane.b32.xlu0 %v1537, 96
        %v1993 = vpop.permute.xlu0 %1992
        %1994 = vrot.lane.b32.xlu0 %v1673, 96
        %v1995 = vpop.permute.xlu0 %1994
        %1996 = vrot.lane.b32.xlu0 %v1738, 96
        %v1997 = vpop.permute.xlu0 %1996
        %2008 = vrot.lane.b32.xlu0 %v1266, 112
        %v2009 = vpop.permute.xlu0 %2008
        %2010 = vrot.lane.b32.xlu0 %v1402, 112
        %v2011 = vpop.permute.xlu0 %2010
        %2012 = vrot.lane.b32.xlu0 %v1538, 112
        %v2013 = vpop.permute.xlu0 %2012
        %2014 = vrot.lane.b32.xlu0 %v1674, 112
        %v2015 = vpop.permute.xlu0 %2014
        %2016 = vrot.lane.b32.xlu0 %v1742, 112
        %v2017 = vpop.permute.xlu0 %2016
        %vm2023 = vcmask 130048
        %v2024 = vsel %vm2023, %v647, %v1749
        %v2025 = vsel %vm2023, %v783, %v1751
        %v2026 = vsel %vm2023, %v919, %v1753
        %v2027 = vsel %vm2023, %v1055, %v1755
        %v2028 = vsel %vm2023, %v1103, %v1757
        %vm2029 = vcmask 261120
        %v2030 = vsel %vm2029, %v2024, %v1769
        %v2031 = vsel %vm2029, %v2025, %v1771
        %v2032 = vsel %vm2029, %v2026, %v1773
        %v2033 = vsel %vm2029, %v2027, %v1775
        %v2034 = vsel %vm2029, %v2028, %v1777
        %vm2035 = vcmask 392192
        %v2036 = vsel %vm2035, %v2030, %v1789
        %v2037 = vsel %vm2035, %v2031, %v1791
        %v2038 = vsel %vm2035, %v2032, %v1793
        %v2039 = vsel %vm2035, %v2033, %v1795
        %v2040 = vsel %vm2035, %v2034, %v1797
        %vm2041 = vcmask 523264
        %v2042 = vsel %vm2041, %v2036, %v1809
        %v2043 = vsel %vm2041, %v2037, %v1811
        %v2044 = vsel %vm2041, %v2038, %v1813
        %v2045 = vsel %vm2041, %v2039, %v1815
        %v2046 = vsel %vm2041, %v2040, %v1817
        %vm2047 = vcmask 654336
        %v2048 = vsel %vm2047, %v2042, %v1829
        %v2049 = vsel %vm2047, %v2043, %v1831
        %v2050 = vsel %vm2047, %v2044, %v1833
        %v2051 = vsel %vm2047, %v2045, %v1835
        %v2052 = vsel %vm2047, %v2046, %v1837
        %vm2053 = vcmask 785408
        %v2054 = vsel %vm2053, %v2048, %v1849
        %v2055 = vsel %vm2053, %v2049, %v1851
        %v2056 = vsel %vm2053, %v2050, %v1853
        %v2057 = vsel %vm2053, %v2051, %v1855
        %v2058 = vsel %vm2053, %v2052, %v1857
        %vm2059 = vcmask 916480
        %v2060 = vsel %vm2059, %v2054, %v1869
        %v2061 = vsel %vm2059, %v2055, %v1871
        %v2062 = vsel %vm2059, %v2056, %v1873
        %v2063 = vsel %vm2059, %v2057, %v1875
        %v2064 = vsel %vm2059, %v2058, %v1877
        %v2065 = vsel %vm2023, %v1259, %v1889
        %v2066 = vsel %vm2023, %v1395, %v1891
        %v2067 = vsel %vm2023, %v1531, %v1893
        %v2068 = vsel %vm2023, %v1667, %v1895
        %v2069 = vsel %vm2023, %v1715, %v1897
        %v2070 = vsel %vm2029, %v2065, %v1909
        %v2071 = vsel %vm2029, %v2066, %v1911
        %v2072 = vsel %vm2029, %v2067, %v1913
        %v2073 = vsel %vm2029, %v2068, %v1915
        %v2074 = vsel %vm2029, %v2069, %v1917
        %v2075 = vsel %vm2035, %v2070, %v1929
        %v2076 = vsel %vm2035, %v2071, %v1931
        %v2077 = vsel %vm2035, %v2072, %v1933
        %v2078 = vsel %vm2035, %v2073, %v1935
        %v2079 = vsel %vm2035, %v2074, %v1937
        %v2080 = vsel %vm2041, %v2075, %v1949
        %v2081 = vsel %vm2041, %v2076, %v1951
        %v2082 = vsel %vm2041, %v2077, %v1953
        %v2083 = vsel %vm2041, %v2078, %v1955
        %v2084 = vsel %vm2041, %v2079, %v1957
        %v2085 = vsel %vm2047, %v2080, %v1969
        %v2086 = vsel %vm2047, %v2081, %v1971
        %v2087 = vsel %vm2047, %v2082, %v1973
        %v2088 = vsel %vm2047, %v2083, %v1975
        %v2089 = vsel %vm2047, %v2084, %v1977
        %v2090 = vsel %vm2053, %v2085, %v1989
        %v2091 = vsel %vm2053, %v2086, %v1991
        %v2092 = vsel %vm2053, %v2087, %v1993
        %v2093 = vsel %vm2053, %v2088, %v1995
        %v2094 = vsel %vm2053, %v2089, %v1997
        %v2095 = vsel %vm2059, %v2090, %v2009
        %v2096 = vsel %vm2059, %v2091, %v2011
        %v2097 = vsel %vm2059, %v2092, %v2013
        %v2098 = vsel %vm2059, %v2093, %v2015
        %v2099 = vsel %vm2059, %v2094, %v2017
        %v2100 = vpack.c.bf16 %v2061, %v2060
        %v2101 = vpack.c.bf16 %v2096, %v2095
        %v2102 = vpack.c.bf16 %v2063, %v2062
        %v2103 = vpack.c.bf16 %v2098, %v2097
        %v2104 = vpack.c.bf16 %v2064, %v2064
        %v2105 = vpack.c.bf16 %v2099, %v2099
        %v2106 = vld [vmem:[%s1] sm:$0xf]
        %v2107 = vld [vmem:[%s1 + $0x4] sm:$0xf]
        %v2108 = vld [vmem:[%s1 + $0x8] sm:$0xf]
        %v2109 = vld [vmem:[%s1 + $0xc] sm:$0xf]
        %v2110 = vld [vmem:[%s1 + $0x10] sm:$0xf]
        %v2111 = vld [vmem:[%s1 + $0x14] sm:$0xf]
        %v2112 = vld [vmem:[%s1 + $0x18] sm:$0xf]
        %v2113 = vld [vmem:[%s1 + $0x1c] sm:$0xf]
        %v2122 = vunpack.c.l.b16 %v2106
        %v2123 = vunpack.c.l.b16 %v2107
        %v2124 = vunpack.c.l.b16 %v2108
        %v2125 = vunpack.c.l.b16 %v2109
        %v2126 = vunpack.c.l.b16 %v2110
        %v2127 = vunpack.c.l.b16 %v2111
        %v2128 = vunpack.c.l.b16 %v2112
        %v2129 = vunpack.c.l.b16 %v2113
        %v2130 = vpack.c.b16 %v2123, %v2122
        %v2131 = vpack.c.b16 %v2125, %v2124
        %v2132 = vpack.c.b16 %v2127, %v2126
        %v2133 = vpack.c.b16 %v2129, %v2128
        %vm2134 = vcmask 293888
        %v2136 = vsel %vm2134, %v2130, 0
        %v2139 = vsel %vm2134, %v2131, 0
        %v2142 = vsel %vm2134, %v2132, 0
        %v2145 = vsel %vm2134, %v2133, 0
        %vm2147 = vcmask 1041408
        %v2149 = vsel %vm2147, %v2104, 0
        %v2152 = vsel %vm2147, %v2105, 0
        %2154 = vmatprep.subr.bf16.mxu0 %v2101
        %2155 = vmatpush1.bf16.msra.mxu0 %v2100
        %2156 = vmatprep.subr.bf16.mxu0 %v2103
        %2157 = vmatpush1.bf16.msra.mxu0 %v2102
        %2158 = vmatprep.subr.bf16.mxu0 %v2152
        %2159 = vmatpush1.bf16.msra.mxu0 %v2149
        %2160 = vmatprep.subr.bf16.mxu0 0
        %2161 = vmatpush1.bf16.msra.mxu0 0
        %2162 = vmatprep.subr.bf16.mxu0 0
        %2163 = vmatpush1.bf16.msra.mxu0 0
        %2164 = vmatprep.subr.bf16.mxu0 0
        %2165 = vmatpush1.bf16.msra.mxu0 0
        %2166 = vmatprep.subr.bf16.mxu0 0
        %2167 = vmatpush1.bf16.msra.mxu0 0
        %2168 = vmatprep.subr.bf16.mxu0 0
        %2169 = vmatpush1.bf16.msra.mxu0 0
        %2170 = vmatprep.subr.bf16.mxu0 0
        %2171 = vmatpush1.bf16.msra.mxu0 0
        %2172 = vmatprep.subr.bf16.mxu0 0
        %2173 = vmatpush1.bf16.msra.mxu0 0
        %2174 = vmatprep.subr.bf16.mxu0 0
        %2175 = vmatpush1.bf16.msra.mxu0 0
        %2176 = vmatprep.subr.bf16.mxu0 0
        %2177 = vmatpush1.bf16.msra.mxu0 0
        %2178 = vmatprep.subr.bf16.mxu0 0
        %2179 = vmatpush1.bf16.msra.mxu0 0
        %2180 = vmatprep.subr.bf16.mxu0 0
        %2181 = vmatpush1.bf16.msra.mxu0 0
        %2182 = vmatprep.subr.bf16.mxu0 0
        %2183 = vmatpush1.bf16.msra.mxu0 0
        %2184 = vmatprep.subr.bf16.mxu0 0
        %2185 = vmatpush1.bf16.msra.mxu0 0
        %2186 = vmatprep.mubr.bf16.mxu0 0
        %2187 = vmatmul.mubr.bf16.gmra.mrb[0].mxu0 %v2136
        %v2188 = vpop.f32.mrb[0].mxu0
        %v2189 = vadd.f32 0.0, %v2188
        %v2190 = vpop.f32.mrb[0].mxu0
        %v2191 = vadd.f32 0.0, %v2190
        %v2192 = vpop.f32.mrb[0].mxu0
        %v2193 = vadd.f32 0.0, %v2192
        %v2194 = vpop.f32.mrb[0].mxu0
        %v2195 = vadd.f32 0.0, %v2194
        %2196 = vmatprep.mubr.bf16.mxu0 0
        %2197 = vmatmul.mubr.bf16.gmra.mrb[0].mxu0 %v2139
        %v2198 = vpop.f32.mrb[0].mxu0
        %v2199 = vadd.f32 0.0, %v2198
        %v2200 = vpop.f32.mrb[0].mxu0
        %v2201 = vadd.f32 0.0, %v2200
        %v2202 = vpop.f32.mrb[0].mxu0
        %v2203 = vadd.f32 0.0, %v2202
        %v2204 = vpop.f32.mrb[0].mxu0
        %v2205 = vadd.f32 0.0, %v2204
        %2206 = vmatprep.mubr.bf16.mxu0 0
        %2207 = vmatmul.mubr.bf16.gmra.mrb[0].mxu0 %v2142
        %v2208 = vpop.f32.mrb[0].mxu0
        %v2209 = vadd.f32 0.0, %v2208
        %v2210 = vpop.f32.mrb[0].mxu0
        %v2211 = vadd.f32 0.0, %v2210
        %v2212 = vpop.f32.mrb[0].mxu0
        %v2213 = vadd.f32 0.0, %v2212
        %v2214 = vpop.f32.mrb[0].mxu0
        %v2215 = vadd.f32 0.0, %v2214
        %2216 = vmatprep.mubr.bf16.mxu0 0
        %2217 = vmatmul.mubr.bf16.gmra.mrb[0].mxu0 %v2145
        %v2218 = vpop.f32.mrb[0].mxu0
        %v2219 = vadd.f32 0.0, %v2218
        %v2220 = vpop.f32.mrb[0].mxu0
        %v2221 = vadd.f32 0.0, %v2220
        %v2222 = vpop.f32.mrb[0].mxu0
        %v2223 = vadd.f32 0.0, %v2222
        %v2224 = vpop.f32.mrb[0].mxu0
        %v2225 = vadd.f32 0.0, %v2224
        %2226 = vdwg.mxu0
        %v2227 = vld [vmem:[%s2] sm:$0xff]
        %v2228 = vld [vmem:[%s2 + $0x8] sm:$0xff]
        %v2229 = vld [vmem:[%s2 + $0x10] sm:$0xff]
        %v2230 = vld [vmem:[%s2 + $0x18] sm:$0xff]
        %v2231 = vld [vmem:[%s2 + $0x20] sm:$0xff]
        %v2232 = vld [vmem:[%s2 + $0x28] sm:$0xff]
        %v2233 = vld [vmem:[%s2 + $0x30] sm:$0xff]
        %v2234 = vld [vmem:[%s2 + $0x38] sm:$0xff]
        %v2235 = vadd.f32 %v2189, %v2191
        %2236 = vadd.xlane.f32.xlu0 %v2235
        %v2237 = vpop.xlane.xlu0 %2236
        %v2238 = vadd.f32 %v2193, %v2195
        %2239 = vadd.xlane.f32.xlu0 %v2238
        %v2240 = vpop.xlane.xlu0 %2239
        %v2241 = vadd.f32 %v2199, %v2201
        %2242 = vadd.xlane.f32.xlu0 %v2241
        %v2243 = vpop.xlane.xlu0 %2242
        %v2244 = vadd.f32 %v2203, %v2205
        %2245 = vadd.xlane.f32.xlu0 %v2244
        %v2246 = vpop.xlane.xlu0 %2245
        %v2247 = vadd.f32 %v2209, %v2211
        %2248 = vadd.xlane.f32.xlu0 %v2247
        %v2249 = vpop.xlane.xlu0 %2248
        %v2250 = vadd.f32 %v2213, %v2215
        %2251 = vadd.xlane.f32.xlu0 %v2250
        %v2252 = vpop.xlane.xlu0 %2251
        %v2253 = vadd.f32 %v2219, %v2221
        %2254 = vadd.xlane.f32.xlu0 %v2253
        %v2255 = vpop.xlane.xlu0 %2254
        %v2256 = vadd.f32 %v2223, %v2225
        %2257 = vadd.xlane.f32.xlu0 %v2256
        %v2258 = vpop.xlane.xlu0 %2257
        %v2259 = vmul.f32 %v2189, %v2189
        %v2260 = vmul.f32 %v2191, %v2191
        %v2261 = vmul.f32 %v2193, %v2193
        %v2262 = vmul.f32 %v2195, %v2195
        %v2263 = vmul.f32 %v2199, %v2199
        %v2264 = vmul.f32 %v2201, %v2201
        %v2265 = vmul.f32 %v2203, %v2203
        %v2266 = vmul.f32 %v2205, %v2205
        %v2267 = vmul.f32 %v2209, %v2209
        %v2268 = vmul.f32 %v2211, %v2211
        %v2269 = vmul.f32 %v2213, %v2213
        %v2270 = vmul.f32 %v2215, %v2215
        %v2271 = vmul.f32 %v2219, %v2219
        %v2272 = vmul.f32 %v2221, %v2221
        %v2273 = vmul.f32 %v2223, %v2223
        %v2274 = vmul.f32 %v2225, %v2225
        %v2275 = vadd.f32 %v2259, %v2260
        %2276 = vadd.xlane.f32.xlu0 %v2275
        %v2277 = vpop.xlane.xlu0 %2276
        %v2278 = vadd.f32 %v2261, %v2262
        %2279 = vadd.xlane.f32.xlu0 %v2278
        %v2280 = vpop.xlane.xlu0 %2279
        %v2281 = vadd.f32 %v2263, %v2264
        %2282 = vadd.xlane.f32.xlu0 %v2281
        %v2283 = vpop.xlane.xlu0 %2282
        %v2284 = vadd.f32 %v2265, %v2266
        %2285 = vadd.xlane.f32.xlu0 %v2284
        %v2286 = vpop.xlane.xlu0 %2285
        %v2287 = vadd.f32 %v2267, %v2268
        %2288 = vadd.xlane.f32.xlu0 %v2287
        %v2289 = vpop.xlane.xlu0 %2288
        %v2290 = vadd.f32 %v2269, %v2270
        %2291 = vadd.xlane.f32.xlu0 %v2290
        %v2292 = vpop.xlane.xlu0 %2291
        %v2293 = vadd.f32 %v2271, %v2272
        %2294 = vadd.xlane.f32.xlu0 %v2293
        %v2295 = vpop.xlane.xlu0 %2294
        %v2296 = vadd.f32 %v2273, %v2274
        %2297 = vadd.xlane.f32.xlu0 %v2296
        %v2298 = vpop.xlane.xlu0 %2297
        %v2299 = vmul.f32 %v2227, 256.0
        %v2300 = vmul.f32 %v2228, 256.0
        %v2301 = vmul.f32 %v2229, 256.0
        %v2302 = vmul.f32 %v2230, 256.0
        %v2303 = vmul.f32 %v2231, 256.0
        %v2304 = vmul.f32 %v2232, 256.0
        %v2305 = vmul.f32 %v2233, 256.0
        %v2306 = vmul.f32 %v2234, 256.0
        %v2307 = vadd.f32 %v2237, %v2299
        %v2308 = vadd.f32 %v2240, %v2300
        %v2309 = vadd.f32 %v2243, %v2301
        %v2310 = vadd.f32 %v2246, %v2302
        %v2311 = vadd.f32 %v2249, %v2303
        %v2312 = vadd.f32 %v2252, %v2304
        %v2313 = vadd.f32 %v2255, %v2305
        %v2314 = vadd.f32 %v2258, %v2306
        %v2315 = vmul.f32 %v2227, 2.0
        %v2316 = vmul.f32 %v2228, 2.0
        %v2317 = vmul.f32 %v2229, 2.0
        %v2318 = vmul.f32 %v2230, 2.0
        %v2319 = vmul.f32 %v2231, 2.0
        %v2320 = vmul.f32 %v2232, 2.0
        %v2321 = vmul.f32 %v2233, 2.0
        %v2322 = vmul.f32 %v2234, 2.0
        %v2323 = vmul.f32 %v2315, %v2237
        %v2324 = vmul.f32 %v2316, %v2240
        %v2325 = vmul.f32 %v2317, %v2243
        %v2326 = vmul.f32 %v2318, %v2246
        %v2327 = vmul.f32 %v2319, %v2249
        %v2328 = vmul.f32 %v2320, %v2252
        %v2329 = vmul.f32 %v2321, %v2255
        %v2330 = vmul.f32 %v2322, %v2258
        %v2331 = vadd.f32 %v2277, %v2323
        %v2332 = vadd.f32 %v2280, %v2324
        %v2333 = vadd.f32 %v2283, %v2325
        %v2334 = vadd.f32 %v2286, %v2326
        %v2335 = vadd.f32 %v2289, %v2327
        %v2336 = vadd.f32 %v2292, %v2328
        %v2337 = vadd.f32 %v2295, %v2329
        %v2338 = vadd.f32 %v2298, %v2330
        %v2339 = vmul.f32 %v2227, %v2227
        %v2340 = vmul.f32 %v2228, %v2228
        %v2341 = vmul.f32 %v2229, %v2229
        %v2342 = vmul.f32 %v2230, %v2230
        %v2343 = vmul.f32 %v2231, %v2231
        %v2344 = vmul.f32 %v2232, %v2232
        %v2345 = vmul.f32 %v2233, %v2233
        %v2346 = vmul.f32 %v2234, %v2234
        %v2347 = vmul.f32 %v2339, 256.0
        %v2348 = vmul.f32 %v2340, 256.0
        %v2349 = vmul.f32 %v2341, 256.0
        %v2350 = vmul.f32 %v2342, 256.0
        %v2351 = vmul.f32 %v2343, 256.0
        %v2352 = vmul.f32 %v2344, 256.0
        %v2353 = vmul.f32 %v2345, 256.0
        %v2354 = vmul.f32 %v2346, 256.0
        %v2355 = vadd.f32 %v2331, %v2347
        %v2356 = vadd.f32 %v2332, %v2348
        %v2357 = vadd.f32 %v2333, %v2349
        %v2358 = vadd.f32 %v2334, %v2350
        %v2359 = vadd.f32 %v2335, %v2351
        %v2360 = vadd.f32 %v2336, %v2352
        %v2361 = vadd.f32 %v2337, %v2353
        %v2362 = vadd.f32 %v2338, %v2354
        %v2363 = vmul.f32 %v2307, 0.00390625
        %v2364 = vmul.f32 %v2308, 0.00390625
        %v2365 = vmul.f32 %v2309, 0.00390625
        %v2366 = vmul.f32 %v2310, 0.00390625
        %v2367 = vmul.f32 %v2311, 0.00390625
        %v2368 = vmul.f32 %v2312, 0.00390625
        %v2369 = vmul.f32 %v2313, 0.00390625
        %v2370 = vmul.f32 %v2314, 0.00390625
        %v2371 = vmul.f32 %v2355, 0.00390625
        %v2372 = vmul.f32 %v2356, 0.00390625
        %v2373 = vmul.f32 %v2357, 0.00390625
        %v2374 = vmul.f32 %v2358, 0.00390625
        %v2375 = vmul.f32 %v2359, 0.00390625
        %v2376 = vmul.f32 %v2360, 0.00390625
        %v2377 = vmul.f32 %v2361, 0.00390625
        %v2378 = vmul.f32 %v2362, 0.00390625
        %v2379 = vmul.f32 %v2363, %v2363
        %v2380 = vmul.f32 %v2364, %v2364
        %v2381 = vmul.f32 %v2365, %v2365
        %v2382 = vmul.f32 %v2366, %v2366
        %v2383 = vmul.f32 %v2367, %v2367
        %v2384 = vmul.f32 %v2368, %v2368
        %v2385 = vmul.f32 %v2369, %v2369
        %v2386 = vmul.f32 %v2370, %v2370
        %v2387 = vsub.f32 %v2371, %v2379
        %v2388 = vsub.f32 %v2372, %v2380
        %v2389 = vsub.f32 %v2373, %v2381
        %v2390 = vsub.f32 %v2374, %v2382
        %v2391 = vsub.f32 %v2375, %v2383
        %v2392 = vsub.f32 %v2376, %v2384
        %v2393 = vsub.f32 %v2377, %v2385
        %v2394 = vsub.f32 %v2378, %v2386
        %v2395 = vmax.f32 %v2387, 0.0
        %v2396 = vmax.f32 %v2388, 0.0
        %v2397 = vmax.f32 %v2389, 0.0
        %v2398 = vmax.f32 %v2390, 0.0
        %v2399 = vmax.f32 %v2391, 0.0
        %v2400 = vmax.f32 %v2392, 0.0
        %v2401 = vmax.f32 %v2393, 0.0
        %v2402 = vmax.f32 %v2394, 0.0
        %v2403 = vadd.f32 %v2395, 1e-05
        %v2404 = vadd.f32 %v2396, 1e-05
        %v2405 = vadd.f32 %v2397, 1e-05
        %v2406 = vadd.f32 %v2398, 1e-05
        %v2407 = vadd.f32 %v2399, 1e-05
        %v2408 = vadd.f32 %v2400, 1e-05
        %v2409 = vadd.f32 %v2401, 1e-05
        %v2410 = vadd.f32 %v2402, 1e-05
        %v2411 = vrsqrt.pop %v2403
        %v2412 = vrsqrt.pop %v2404
        %v2413 = vrsqrt.pop %v2405
        %v2414 = vrsqrt.pop %v2406
        %v2415 = vrsqrt.pop %v2407
        %v2416 = vrsqrt.pop %v2408
        %v2417 = vrsqrt.pop %v2409
        %v2418 = vrsqrt.pop %v2410
        %2427 = vrot.lane.b32.xlu0 %v2411, 1
        %v2428 = vpop.permute.xlu0 %2427
        %2429 = vrot.lane.b32.xlu0 %v2412, 1
        %v2430 = vpop.permute.xlu0 %2429
        %2431 = vrot.lane.b32.xlu0 %v2413, 1
        %v2432 = vpop.permute.xlu0 %2431
        %2433 = vrot.lane.b32.xlu0 %v2414, 1
        %v2434 = vpop.permute.xlu0 %2433
        %2435 = vrot.lane.b32.xlu0 %v2415, 1
        %v2436 = vpop.permute.xlu0 %2435
        %2437 = vrot.lane.b32.xlu0 %v2416, 1
        %v2438 = vpop.permute.xlu0 %2437
        %2439 = vrot.lane.b32.xlu0 %v2417, 1
        %v2440 = vpop.permute.xlu0 %2439
        %2441 = vrot.lane.b32.xlu0 %v2418, 1
        %v2442 = vpop.permute.xlu0 %2441
        %v2451 = vmul.f32 %v2227, %v2428
        %v2452 = vmul.f32 %v2228, %v2430
        %v2453 = vmul.f32 %v2229, %v2432
        %v2454 = vmul.f32 %v2230, %v2434
        %v2455 = vmul.f32 %v2231, %v2436
        %v2456 = vmul.f32 %v2232, %v2438
        %v2457 = vmul.f32 %v2233, %v2440
        %v2458 = vmul.f32 %v2234, %v2442
        %v2459 = vsub.f32 %v2227, %v2363
        %v2460 = vsub.f32 %v2228, %v2364
        %v2461 = vsub.f32 %v2229, %v2365
        %v2462 = vsub.f32 %v2230, %v2366
        %v2463 = vsub.f32 %v2231, %v2367
        %v2464 = vsub.f32 %v2232, %v2368
        %v2465 = vsub.f32 %v2233, %v2369
        %v2466 = vsub.f32 %v2234, %v2370
        %2475 = vrot.lane.b32.xlu0 %v2451, 127
        %v2476 = vpop.permute.xlu0 %2475
        %2477 = vrot.lane.b32.xlu0 %v2452, 127
        %v2478 = vpop.permute.xlu0 %2477
        %2479 = vrot.lane.b32.xlu0 %v2453, 127
        %v2480 = vpop.permute.xlu0 %2479
        %2481 = vrot.lane.b32.xlu0 %v2454, 127
        %v2482 = vpop.permute.xlu0 %2481
        %2483 = vrot.lane.b32.xlu0 %v2455, 127
        %v2484 = vpop.permute.xlu0 %2483
        %2485 = vrot.lane.b32.xlu0 %v2456, 127
        %v2486 = vpop.permute.xlu0 %2485
        %2487 = vrot.lane.b32.xlu0 %v2457, 127
        %v2488 = vpop.permute.xlu0 %2487
        %2489 = vrot.lane.b32.xlu0 %v2458, 127
        %v2490 = vpop.permute.xlu0 %2489
        %v2499 = vmul.f32 %v2459, %v2476
        %v2500 = vmul.f32 %v2460, %v2478
        %v2501 = vmul.f32 %v2461, %v2480
        %v2502 = vmul.f32 %v2462, %v2482
        %v2503 = vmul.f32 %v2463, %v2484
        %v2504 = vmul.f32 %v2464, %v2486
        %v2505 = vmul.f32 %v2465, %v2488
        %v2506 = vmul.f32 %v2466, %v2490
        %2515 = vrot.lane.b32.xlu0 %v2227, 126
        %v2516 = vpop.permute.xlu0 %2515
        %2517 = vrot.lane.b32.xlu0 %v2228, 126
        %v2518 = vpop.permute.xlu0 %2517
        %2519 = vrot.lane.b32.xlu0 %v2229, 126
        %v2520 = vpop.permute.xlu0 %2519
        %2521 = vrot.lane.b32.xlu0 %v2230, 126
        %v2522 = vpop.permute.xlu0 %2521
        %2523 = vrot.lane.b32.xlu0 %v2231, 126
        %v2524 = vpop.permute.xlu0 %2523
        %2525 = vrot.lane.b32.xlu0 %v2232, 126
        %v2526 = vpop.permute.xlu0 %2525
        %2527 = vrot.lane.b32.xlu0 %v2233, 126
        %v2528 = vpop.permute.xlu0 %2527
        %2529 = vrot.lane.b32.xlu0 %v2234, 126
        %v2530 = vpop.permute.xlu0 %2529
        %v2539 = vadd.f32 %v2499, %v2516
        %v2540 = vadd.f32 %v2500, %v2518
        %v2541 = vadd.f32 %v2501, %v2520
        %v2542 = vadd.f32 %v2502, %v2522
        %v2543 = vadd.f32 %v2503, %v2524
        %v2544 = vadd.f32 %v2504, %v2526
        %v2545 = vadd.f32 %v2505, %v2528
        %v2546 = vadd.f32 %v2506, %v2530
        %2547 = vset.pattern.permute.xlu0 1
        %2548 = vperm.xlu0 %2547, %v2451
        %v2549 = vpop.permute.xlu0 %2548
        %2551 = vset.pattern.permute.xlu0 1
        %2552 = vperm.xlu0 %2551, %v2452
        %v2553 = vpop.permute.xlu0 %2552
        %2555 = vset.pattern.permute.xlu0 1
        %2556 = vperm.xlu0 %2555, %v2453
        %v2557 = vpop.permute.xlu0 %2556
        %2559 = vset.pattern.permute.xlu0 1
        %2560 = vperm.xlu0 %2559, %v2454
        %v2561 = vpop.permute.xlu0 %2560
        %2563 = vset.pattern.permute.xlu0 1
        %2564 = vperm.xlu0 %2563, %v2455
        %v2565 = vpop.permute.xlu0 %2564
        %2567 = vset.pattern.permute.xlu0 1
        %2568 = vperm.xlu0 %2567, %v2456
        %v2569 = vpop.permute.xlu0 %2568
        %2571 = vset.pattern.permute.xlu0 1
        %2572 = vperm.xlu0 %2571, %v2457
        %v2573 = vpop.permute.xlu0 %2572
        %2575 = vset.pattern.permute.xlu0 1
        %2576 = vperm.xlu0 %2575, %v2458
        %v2577 = vpop.permute.xlu0 %2576
        %v2579 = vmul.f32 %v2189, %v2549
        %v2580 = vmul.f32 %v2191, %v2549
        %v2581 = vmul.f32 %v2193, %v2553
        %v2582 = vmul.f32 %v2195, %v2553
        %v2583 = vmul.f32 %v2199, %v2557
        %v2584 = vmul.f32 %v2201, %v2557
        %v2585 = vmul.f32 %v2203, %v2561
        %v2586 = vmul.f32 %v2205, %v2561
        %v2587 = vmul.f32 %v2209, %v2565
        %v2588 = vmul.f32 %v2211, %v2565
        %v2589 = vmul.f32 %v2213, %v2569
        %v2590 = vmul.f32 %v2215, %v2569
        %v2591 = vmul.f32 %v2219, %v2573
        %v2592 = vmul.f32 %v2221, %v2573
        %v2593 = vmul.f32 %v2223, %v2577
        %v2594 = vmul.f32 %v2225, %v2577
        %2596 = vset.pattern.permute.xlu0 0
        %2597 = vperm.xlu0 %2596, %v2539
        %v2598 = vpop.permute.xlu0 %2597
        %2601 = vset.pattern.permute.xlu0 0
        %2602 = vperm.xlu0 %2601, %v2540
        %v2603 = vpop.permute.xlu0 %2602
        %2606 = vset.pattern.permute.xlu0 0
        %2607 = vperm.xlu0 %2606, %v2541
        %v2608 = vpop.permute.xlu0 %2607
        %2611 = vset.pattern.permute.xlu0 0
        %2612 = vperm.xlu0 %2611, %v2542
        %v2613 = vpop.permute.xlu0 %2612
        %2616 = vset.pattern.permute.xlu0 0
        %2617 = vperm.xlu0 %2616, %v2543
        %v2618 = vpop.permute.xlu0 %2617
        %2621 = vset.pattern.permute.xlu0 0
        %2622 = vperm.xlu0 %2621, %v2544
        %v2623 = vpop.permute.xlu0 %2622
        %2626 = vset.pattern.permute.xlu0 0
        %2627 = vperm.xlu0 %2626, %v2545
        %v2628 = vpop.permute.xlu0 %2627
        %2631 = vset.pattern.permute.xlu0 0
        %2632 = vperm.xlu0 %2631, %v2546
        %v2633 = vpop.permute.xlu0 %2632
        %v2635 = vadd.f32 %v2579, %v2598
        %v2636 = vadd.f32 %v2580, %v2598
        %v2637 = vadd.f32 %v2581, %v2603
        %v2638 = vadd.f32 %v2582, %v2603
        %v2639 = vadd.f32 %v2583, %v2608
        %v2640 = vadd.f32 %v2584, %v2608
        %v2641 = vadd.f32 %v2585, %v2613
        %v2642 = vadd.f32 %v2586, %v2613
        %v2643 = vadd.f32 %v2587, %v2618
        %v2644 = vadd.f32 %v2588, %v2618
        %v2645 = vadd.f32 %v2589, %v2623
        %v2646 = vadd.f32 %v2590, %v2623
        %v2647 = vadd.f32 %v2591, %v2628
        %v2648 = vadd.f32 %v2592, %v2628
        %v2649 = vadd.f32 %v2593, %v2633
        %v2650 = vadd.f32 %v2594, %v2633
        %v2651 = vmax.f32 %v2635, 0.0
        %v2652 = vmax.f32 %v2636, 0.0
        %v2653 = vmax.f32 %v2637, 0.0
        %v2654 = vmax.f32 %v2638, 0.0
        %v2655 = vmax.f32 %v2639, 0.0
        %v2656 = vmax.f32 %v2640, 0.0
        %v2657 = vmax.f32 %v2641, 0.0
        %v2658 = vmax.f32 %v2642, 0.0
        %v2659 = vmax.f32 %v2643, 0.0
        %v2660 = vmax.f32 %v2644, 0.0
        %v2661 = vmax.f32 %v2645, 0.0
        %v2662 = vmax.f32 %v2646, 0.0
        %v2663 = vmax.f32 %v2647, 0.0
        %v2664 = vmax.f32 %v2648, 0.0
        %v2665 = vmax.f32 %v2649, 0.0
        %v2666 = vmax.f32 %v2650, 0.0
        %2667 = vst [vmem:[%s188] sm:$0xff] %v2651
        %2668 = vst [vmem:[%s188 + $0x8] sm:$0xff] %v2652
        %2669 = vst [vmem:[%s188 + $0x10] sm:$0xff] %v2653
        %2670 = vst [vmem:[%s188 + $0x18] sm:$0xff] %v2654
        %2671 = vst [vmem:[%s188 + $0x20] sm:$0xff] %v2655
        %2672 = vst [vmem:[%s188 + $0x28] sm:$0xff] %v2656
        %2673 = vst [vmem:[%s188 + $0x30] sm:$0xff] %v2657
        %2674 = vst [vmem:[%s188 + $0x38] sm:$0xff] %v2658
        %2675 = vst [vmem:[%s188 + $0x40] sm:$0xff] %v2659
        %2676 = vst [vmem:[%s188 + $0x48] sm:$0xff] %v2660
        %2677 = vst [vmem:[%s188 + $0x50] sm:$0xff] %v2661
        %2678 = vst [vmem:[%s188 + $0x58] sm:$0xff] %v2662
        %2679 = vst [vmem:[%s188 + $0x60] sm:$0xff] %v2663
        %2680 = vst [vmem:[%s188 + $0x68] sm:$0xff] %v2664
        %2681 = vst [vmem:[%s188 + $0x70] sm:$0xff] %v2665
        %2682 = vst [vmem:[%s188 + $0x78] sm:$0xff] %v2666
        %s2683 = sand.u32 %s96, 1
        %s2684 = scalar_lea.sflag [#allocation4], %s2683
        %s2685 = sand.u32 %s96, 1
        %s2686 = smul.addr %s2685, 128
        %s2687 = scalar_lea.vmem [#allocation5], %s2686
        // Predicated region
        $region37: #{tpu_custom_call.1} parent=31 // pred_check
          %p2688 = pneg %p106
        $region38: #{tpu_custom_call.1} parent=31 // pred_check_branch
          %2690 = sbr.rel (%p2688) target = $region40
        $region39: #{tpu_custom_call.1} parent=31 // pred_region
          %s2692 = ssub.s32 2048, 2048
          %2693 = vsyncadd %s2684, %s2692
          %s2694 = smul.addr %s20, 16
          %s2695 = smul.addr %s2694, 128
          %s2696 = scalar_lea.hbm %s3, %s2695
          %s2697 = sshll.u32 %s2687, 4
          %s2698 = int_to_ptr.vmem [resolvable:$true] %s2697
          %2703 = dma.vmem_to_hbm [thread:$0]  %s2698, 2048, %s2696, %s2684, 256, 256, 16
        $region40: #{tpu_custom_call.1} parent=31 // pred_fallthru
          _
      $region32: #{tpu_custom_call.1} parent=5 // pred_fallthru
        _
      %p2704 = scmp.le.s32.totalorder 2, %s15
      // Predicated region
      $region41: #{tpu_custom_call.1} parent=5 // pred_check
        %p2705 = pneg %p2704
      $region42: #{tpu_custom_call.1} parent=5 // pred_check_branch
        %2707 = sbr.rel (%p2705) target = $region44
      $region43: #{tpu_custom_call.1} parent=5 // pred_region
        %s2708 = ssub.s32 %s15, 2
        // Predicated region
        $region45: #{tpu_custom_call.1} parent=43 // pred_check
          %p2709 = pneg %p112
        $region46: #{tpu_custom_call.1} parent=43 // pred_check_branch
          %2711 = sbr.rel (%p2709) target = $region48
        $region47: #{tpu_custom_call.1} parent=43 // pred_region
          %s2712 = sand.u32 %s97, 1
          %s2713 = scalar_lea.sflag [#allocation4], %s2712
          %s2714 = sand.u32 %s97, 1
          %s2715 = smul.addr %s2714, 128
          %s2716 = scalar_lea.vmem [#allocation5], %s2715
          %2717 = dma.done %s2713, 2048
        $region48: #{tpu_custom_call.1} parent=43 // pred_fallthru
          _
      $region44: #{tpu_custom_call.1} parent=5 // pred_fallthru
        _
    $region6: #{tpu_custom_call.1} parent=1 // loop_footer
      %s19 = sadd.s32 1, %s15
    $region7: #{tpu_custom_call.1} parent=1 // loop_footer_branch
      %14 = sbr.rel target = $region3
    $region8: #{tpu_custom_call.1} parent=1 // loop_exit
      _
    %2718 = vsyncpa [#allocation3], 1
    %s2719 = scalar_lea.sflag [#allocation3], 1
    %2720 = vsyncpa %s2719, 1
    %2721 = vsyncpa [#allocation4], 1
    %s2722 = scalar_lea.sflag [#allocation4], 1
    %2723 = vsyncpa %s2722, 1

</llo_original>
